<compile_context>
chip_gen: v7x
topology: tpu7x:2x2x1
jax: 0.10.0
libtpu: 0.0.40
codegen_flags: <defaults>
</compile_context>

<pallas_src>
import jax
import jax.numpy as jnp
from jax.experimental import pallas as pl
from jax.experimental.pallas import tpu as pltpu

# ----------------------------- small config ---------------------------------
NUM_GRAPHS = 2            # batch of molecules
NODES_PER_GRAPH = 8       # fixed node count per graph (simplification)
TOTAL_NODES = NUM_GRAPHS * NODES_PER_GRAPH
NUM_ATOM_FEATURES = 7     # dataDims['num atom features']
CRYSTAL_FEATS_TO_IGNORE = 2
ATOM_X_KEEP = NUM_ATOM_FEATURES - CRYSTAL_FEATS_TO_IGNORE   # = 5
NODE_IN_DIM = ATOM_X_KEEP + 3                               # = 8
ATOM_EMBED_DIM = 16       # conditioner graph embedding size
FC_DEPTH = 32             # conditioner fc_depth
COND_OUTPUT_DIM = 32      # config.conditioner.output_dim
CONV_EMBED_DIM = 4        # config.conditioner.decoder_embedding_dim
INIT_DECODER_SIZE = 2     # config.conditioner.init_decoder_size
N_CLASSES = 3             # len(config.conditioner_classes) + 1
MAX_MOL_RADIUS = 4.0      # config.max_molecule_radius
DECODER_STRIDES = (2, 2)  # get_strides(8, init_size=2) -> 2 -> 4 -> 8
MLP_FILTERS = 256
RESCALE_DIM = CONV_EMBED_DIM * INIT_DECODER_SIZE ** 3       # = 32
DEC1_SIZE = INIT_DECODER_SIZE * DECODER_STRIDES[0]          # = 4
FINAL_SIZE = DEC1_SIZE * DECODER_STRIDES[1]                 # = 8
DEC1_OUT = CONV_EMBED_DIM * DEC1_SIZE ** 3                  # = 256
DEC2_OUT = CONV_EMBED_DIM * FINAL_SIZE ** 3                 # = 2048
N_VOX_FINAL = FINAL_SIZE ** 3                               # = 512

# packed "small" blob (all <=32-lane conditioner params), 8-row-aligned sections
SB_COLS = FC_DEPTH        # 32
EW_OFF, EB_OFF = 0, 8     # embed_w (8,16), embed_b (1,16)
F1W_OFF, F1B_OFF = 16, 32  # fc1_w (16,32), fc1_b (1,32)
F2W_OFF, F2B_OFF = 40, 72  # fc2_w (32,32), fc2_b (1,32)
CRW_OFF, CRB_OFF = 80, 112  # folded cond_out@rescale (32,32), bias (1,32)
SB_ROWS = 120

# packed "wide" blob (256-lane rows: MLP biases/LN params + dec1 bias)
WB_M1B, WB_M1G, WB_M1BE, WB_M2B, WB_M2G, WB_M2BE, WB_MOW, WB_MOB, WB_D1B = range(9)
WB_ROWS = 9

_VMEM = pl.BlockSpec(memory_space=pltpu.MemorySpace.VMEM)
_SMEM = pl.BlockSpec(memory_space=pltpu.MemorySpace.SMEM)
_ANY = pl.BlockSpec(memory_space=pl.ANY)


# ----------------------------- the fused kernel ------------------------------
def _fused_autoencoder_kernel(
        # graph inputs
        x_ref, pos_ref, batch_ref,
        # packed small f32 params, packed wide f32 params, dec2 per-voxel bias
        small_ref, wide_ref, d2b_ref,
        # decoder dense sub-pixel matrices, left in HBM (manual DMA below)
        d1w_hbm, d2w_hbm,
        # MLP matmul weights (bf16)
        m1w_ref, m2w_ref,
        # 1x1x1 conv head scalars (flat SMEM)
        head_ref,
        # outputs
        vol_ref, scalar_ref,
        # scratch: decoder weight VMEM buffers + DMA semaphores
        d1w_buf, d2w_buf, dma_sem):
    f32 = jnp.float32
    bf16 = jnp.bfloat16

    # ---- kick off the decoder-weight DMAs first; they overlap conditioner+MLP
    cp1 = pltpu.make_async_copy(d1w_hbm, d1w_buf, dma_sem.at[0])
    cp2 = pltpu.make_async_copy(d2w_hbm, d2w_buf, dma_sem.at[1])
    cp1.start()
    cp2.start()

    # ------------- conditioner (stand-in) + folded rescale_output_dims -------
    # normed_pos = pos / max_molecule_radius is folded into the 3 position rows
    # of embed_w at init; cat(x[:, :-ignore], normed_pos) is a split matmul.
    ew = small_ref[EW_OFF:EW_OFF + NODE_IN_DIM, :ATOM_EMBED_DIM]
    h = (jnp.dot(x_ref[:, :ATOM_X_KEEP], ew[:ATOM_X_KEEP, :],
                 preferred_element_type=f32)
         + jnp.dot(pos_ref[...], ew[ATOM_X_KEEP:, :], preferred_element_type=f32)
         + small_ref[EB_OFF:EB_OFF + 1, :ATOM_EMBED_DIM])
    # TODO(synk): jax.nn.gelu is the tanh approximation; PyTorch nn.GELU default
    # is exact erf — acceptable for tolerance-level parity, kept for safe lowering.
    h = jax.nn.gelu(h)                                        # (nodes, embed)

    # graph mean-pool as a segment-mean matmul built from the batch index
    gids = jax.lax.broadcasted_iota(jnp.int32, (NUM_GRAPHS, TOTAL_NODES), 0)
    onehot = (batch_ref[...] == gids).astype(f32)             # (graphs, nodes)
    pool = onehot / jnp.maximum(jnp.sum(onehot, axis=-1, keepdims=True), 1.0)
    g = jnp.dot(pool, h, preferred_element_type=f32)          # (graphs, embed)

    g = jax.nn.gelu(
        jnp.dot(g, small_ref[F1W_OFF:F1W_OFF + ATOM_EMBED_DIM, :FC_DEPTH],
                preferred_element_type=f32)
        + small_ref[F1B_OFF:F1B_OFF + 1, :FC_DEPTH])
    g = jax.nn.gelu(
        jnp.dot(g, small_ref[F2W_OFF:F2W_OFF + FC_DEPTH, :FC_DEPTH],
                preferred_element_type=f32)
        + small_ref[F2B_OFF:F2B_OFF + 1, :FC_DEPTH])
    # cond_out and rescale_output_dims folded into one (32,32) matrix at init
    enc = (jnp.dot(g, small_ref[CRW_OFF:CRW_OFF + FC_DEPTH, :RESCALE_DIM],
                   preferred_element_type=f32)
           + small_ref[CRB_OFF:CRB_OFF + 1, :RESCALE_DIM])    # (graphs, 32)

    # ------------------------------ MLP head ---------------------------------
    # Runs BEFORE the decoder (depends only on enc) so the big weight DMA keeps
    # hiding.  dropout(0.1) is inference-mode identity.
    def _ln(v, gamma, beta):
        mu = jnp.mean(v, axis=-1, keepdims=True)
        var = jnp.mean((v - mu) ** 2, axis=-1, keepdims=True)
        return (v - mu) * jax.lax.rsqrt(var + 1e-5) * gamma + beta

    m = (jnp.dot(enc.astype(bf16), m1w_ref[...], preferred_element_type=f32)
         + wide_ref[WB_M1B:WB_M1B + 1, :])
    m = jax.nn.gelu(_ln(m, wide_ref[WB_M1G:WB_M1G + 1, :],
                        wide_ref[WB_M1BE:WB_M1BE + 1, :]))
    m = (jnp.dot(m.astype(bf16), m2w_ref[...], preferred_element_type=f32)
         + wide_ref[WB_M2B:WB_M2B + 1, :])
    m = jax.nn.gelu(_ln(m, wide_ref[WB_M2G:WB_M2G + 1, :],
                        wide_ref[WB_M2BE:WB_M2BE + 1, :]))
    # 256 -> 1 projection as a lane reduction (no 1-lane matmul output)
    scalar_ref[...] = (jnp.sum(m * wide_ref[WB_MOW:WB_MOW + 1, :],
                               axis=-1, keepdims=True)
                       + wide_ref[WB_MOB:WB_MOB + 1, 0:1])

    # --------------------------- PointCloudDecoder ---------------------------
    # ConvTranspose3d(k=3, s=2, p=1, op=1) stages folded (at init) into exact
    # dense matrices: bf16 MXU operands, f32 acc, channel-major lane-dense
    # outputs (256 / 2048 lanes).  Wait on each weight DMA only when needed.
    cp1.wait()
    y1 = (jnp.dot(enc.astype(bf16), d1w_buf[...], preferred_element_type=f32)
          + wide_ref[WB_D1B:WB_D1B + 1, :])
    y1 = jnp.maximum(y1, 0.0)                                  # (graphs, 4*4^3)
    cp2.wait()
    y2 = (jnp.dot(y1.astype(bf16), d2w_buf[...], preferred_element_type=f32)
          + d2b_ref[...])
    y2 = jnp.maximum(y2, 0.0)                                  # (graphs, 4*8^3)

    # 1x1x1 Conv3d head: 12 scalar FMAs on the VPU, weights flat in SMEM; each
    # class is written as a lane-dense 512-wide slab (flat NCDHW order).
    for k in range(N_CLASSES):
        acc = head_ref[12 + k] + head_ref[4 * k] * y2[:, :N_VOX_FINAL]
        for c in range(1, CONV_EMBED_DIM):
            acc = acc + head_ref[4 * k + c] * y2[:, c * N_VOX_FINAL:(c + 1) * N_VOX_FINAL]
        vol_ref[:, k * N_VOX_FINAL:(k + 1) * N_VOX_FINAL] = acc


# ----------------------------- parameters ------------------------------------
def _init_linear(key, fan_in, fan_out):
    k1, k2 = jax.random.split(key)
    w = jax.random.normal(k1, (fan_in, fan_out), jnp.float32) / jnp.sqrt(fan_in)
    b = 0.01 * jax.random.normal(k2, (fan_out,), jnp.float32).reshape(1, fan_out)
    return w, b


def _conv_transpose3d_dense(weight, *, stride, pad, outpad, in_size):
    """Exact dense matrix M of a PyTorch ConvTranspose3d: flat_in @ M = flat_out,
    both flattened channel-major (C, D, H, W) in C-order.  Built ONCE at init by
    pushing an identity basis through lax.conv_general_dilated (lhs_dilation =
    transposed conv, flipped/transposed weights), so the runtime kernel never
    sees zero-upsampled data and carries no per-forward weight reshuffling."""
    cin, k = weight.shape[0], weight.shape[2]
    in_dim = cin * in_size ** 3
    basis = jnp.eye(in_dim, dtype=jnp.float32).reshape(
        in_dim, cin, in_size, in_size, in_size)
    w_conv = jnp.flip(weight, axis=(2, 3, 4)).transpose(1, 0, 2, 3, 4)  # (Cout,Cin,k,k,k)
    p_lo, p_hi = k - 1 - pad, k - 1 - pad + outpad
    out = jax.lax.conv_general_dilated(
        basis, w_conv, window_strides=(1, 1, 1),
        padding=[(p_lo, p_hi)] * 3,
        lhs_dilation=(stride, stride, stride),
        dimension_numbers=("NCDHW", "OIDHW", "NCDHW"))
    return out.reshape(in_dim, -1)


def init_params(seed=0):
    keys = iter(jax.random.split(jax.random.PRNGKey(seed), 32))
    p = {}

    # conditioner (molecule_graph_model stand-in): node embed -> pool -> FC stack
    # TODO(synk): molecule_graph_model source (message passing / radial basis /
    # attention) not provided; architecturally-faithful small stand-in used.
    embed_w, embed_b = _init_linear(next(keys), NODE_IN_DIM, ATOM_EMBED_DIM)
    # fold pos / max_molecule_radius into the 3 position rows of the embedding
    embed_w = embed_w.at[ATOM_X_KEEP:, :].multiply(1.0 / MAX_MOL_RADIUS)
    fc1_w, fc1_b = _init_linear(next(keys), ATOM_EMBED_DIM, FC_DEPTH)
    fc2_w, fc2_b = _init_linear(next(keys), FC_DEPTH, FC_DEPTH)
    cond_w, cond_b = _init_linear(next(keys), FC_DEPTH, COND_OUTPUT_DIM)
    resc_w, resc_b = _init_linear(next(keys), COND_OUTPUT_DIM, RESCALE_DIM)
    # fold back-to-back cond_out / rescale_output_dims (no nonlinearity between)
    cr_w = cond_w @ resc_w
    cr_b = cond_b @ resc_w + resc_b

    small = jnp.zeros((SB_ROWS, SB_COLS), jnp.float32)
    small = small.at[EW_OFF:EW_OFF + NODE_IN_DIM, :ATOM_EMBED_DIM].set(embed_w)
    small = small.at[EB_OFF, :ATOM_EMBED_DIM].set(embed_b[0])
    small = small.at[F1W_OFF:F1W_OFF + ATOM_EMBED_DIM, :FC_DEPTH].set(fc1_w)
    small = small.at[F1B_OFF, :FC_DEPTH].set(fc1_b[0])
    small = small.at[F2W_OFF:F2W_OFF + FC_DEPTH, :FC_DEPTH].set(fc2_w)
    small = small.at[F2B_OFF, :FC_DEPTH].set(fc2_b[0])
    small = small.at[CRW_OFF:CRW_OFF + FC_DEPTH, :RESCALE_DIM].set(cr_w)
    small = small.at[CRB_OFF, :RESCALE_DIM].set(cr_b[0])
    p["small_blob"] = small

    # PointCloudDecoder: ConvTranspose3d weights (PyTorch layout Cin,Cout,k,k,k),
    # folded into dense sub-pixel matrices (bf16 MXU operands) + per-voxel biases.
    mats, biases = [], []
    cin, size = CONV_EMBED_DIM, INIT_DECODER_SIZE
    for s in DECODER_STRIDES:
        kw = jax.random.normal(next(keys), (cin, CONV_EMBED_DIM, 3, 3, 3),
                               jnp.float32) / jnp.sqrt(cin * 27)
        kb = 0.01 * jax.random.normal(next(keys), (CONV_EMBED_DIM,), jnp.float32)
        mats.append(_conv_transpose3d_dense(
            kw, stride=s, pad=1, outpad=s - 1, in_size=size).astype(jnp.bfloat16))
        size = size * s
        biases.append(jnp.repeat(kb, size ** 3).reshape(1, -1))
        cin = CONV_EMBED_DIM
    p["dec1_w"], p["dec2_w"] = mats          # (32,256) bf16, (256,2048) bf16
    dec1_b, dec2_b = biases                  # (1,256) f32, (1,2048) f32
    p["dec2_b"] = dec2_b

    # 1x1x1 conv head: flat 1-D SMEM scalars [w(3x4) row-major, then 3 biases]
    head_w = (jax.random.normal(next(keys), (N_CLASSES, CONV_EMBED_DIM), jnp.float32)
              / jnp.sqrt(CONV_EMBED_DIM))
    head_b = 0.01 * jax.random.normal(next(keys), (N_CLASSES,), jnp.float32)
    head = jnp.zeros((16,), jnp.float32)
    head = head.at[:N_CLASSES * CONV_EMBED_DIM].set(head_w.reshape(-1))
    head = head.at[N_CLASSES * CONV_EMBED_DIM:
                   N_CLASSES * CONV_EMBED_DIM + N_CLASSES].set(head_b)
    p["head"] = head

    # MLP (2 hidden Linear->LayerNorm->GELU + 256->1); matmul weights in bf16.
    m1w, m1b = _init_linear(next(keys), RESCALE_DIM, MLP_FILTERS)
    m2w, m2b = _init_linear(next(keys), MLP_FILTERS, MLP_FILTERS)
    mow, mob = _init_linear(next(keys), MLP_FILTERS, 1)
    p["mlp1_w"] = m1w.astype(jnp.bfloat16)
    p["mlp2_w"] = m2w.astype(jnp.bfloat16)

    wide = jnp.zeros((WB_ROWS, MLP_FILTERS), jnp.float32)
    wide = wide.at[WB_M1B].set(m1b[0])
    wide = wide.at[WB_M1G].set(jnp.ones((MLP_FILTERS,), jnp.float32))
    # WB_M1BE / WB_M2BE (LayerNorm betas) stay zero
    wide = wide.at[WB_M2B].set(m2b[0])
    wide = wide.at[WB_M2G].set(jnp.ones((MLP_FILTERS,), jnp.float32))
    wide = wide.at[WB_MOW].set(mow[:, 0])
    wide = wide.at[WB_MOB, 0].set(mob[0, 0])
    wide = wide.at[WB_D1B].set(dec1_b[0])
    p["wide_blob"] = wide
    return p


# ----------------------------- forward pass -----------------------------------
def molecule_autoencoder_forward(p, x_atoms, pos, batch):
    """pos scaling + feature concat, conditioner, rescale_output_dims,
    PointCloudDecoder and MLP — all inside one fused Pallas kernel."""
    args = (
        x_atoms.astype(jnp.float32),
        pos.astype(jnp.float32),
        batch.astype(jnp.int32).reshape(1, TOTAL_NODES),
        p["small_blob"], p["wide_blob"], p["dec2_b"],
        p["dec1_w"], p["dec2_w"],
        p["mlp1_w"], p["mlp2_w"],
        p["head"],
    )
    in_specs = [_VMEM, _VMEM, _VMEM,          # x, pos, batch
                _VMEM, _VMEM, _VMEM,          # small blob, wide blob, dec2 bias
                _ANY, _ANY,                   # dec1_w, dec2_w (manual DMA)
                _VMEM, _VMEM,                 # mlp1_w, mlp2_w
                _SMEM]                        # head scalars
    vol_flat, scalar = pl.pallas_call(
        _fused_autoencoder_kernel,
        out_shape=(
            jax.ShapeDtypeStruct((NUM_GRAPHS, N_CLASSES * N_VOX_FINAL), jnp.float32),
            jax.ShapeDtypeStruct((NUM_GRAPHS, 1), jnp.float32),
        ),
        in_specs=in_specs,
        out_specs=(_VMEM, _VMEM),
        scratch_shapes=[
            pltpu.VMEM((RESCALE_DIM, DEC1_OUT), jnp.bfloat16),   # dec1_w buffer
            pltpu.VMEM((DEC1_OUT, DEC2_OUT), jnp.bfloat16),      # dec2_w buffer
            pltpu.SemaphoreType.DMA((2,)),
        ],
    )(*args)
    # free C-order reshape back to NCDHW (channel/class-major flat layout).
    volume = vol_flat.reshape(NUM_GRAPHS, N_CLASSES, FINAL_SIZE, FINAL_SIZE, FINAL_SIZE)
    return volume, scalar


# ----------------------------- main -------------------------------------------
if __name__ == "__main__":
    params = init_params(seed=0)
    key = jax.random.PRNGKey(0)
    kx, kp = jax.random.split(key)
    x_atoms = jax.random.normal(kx, (TOTAL_NODES, NUM_ATOM_FEATURES), jnp.float32)
    pos = jax.random.normal(kp, (TOTAL_NODES, 3), jnp.float32) * MAX_MOL_RADIUS
    batch = jnp.repeat(jnp.arange(NUM_GRAPHS, dtype=jnp.int32), NODES_PER_GRAPH)

    fwd = jax.jit(molecule_autoencoder_forward)
    volume_out, scalar_out = fwd(params, x_atoms, pos, batch)
    jax.block_until_ready((volume_out, scalar_out))

    assert volume_out.shape == (NUM_GRAPHS, N_CLASSES, FINAL_SIZE, FINAL_SIZE,
                                FINAL_SIZE), volume_out.shape
    assert scalar_out.shape == (NUM_GRAPHS, 1), scalar_out.shape
    print("KERNEL_OK")
</pallas_src>

<mosaic_0001>
module attributes {stable_mosaic.version = 11 : i64} {
  func.func @_fused_autoencoder_kernel(%arg0: memref<16x7xf32, #tpu.memory_space<vmem>>, %arg1: memref<16x3xf32, #tpu.memory_space<vmem>>, %arg2: memref<1x16xi32, #tpu.memory_space<vmem>>, %arg3: memref<120x32xf32, #tpu.memory_space<vmem>>, %arg4: memref<9x256xf32, #tpu.memory_space<vmem>>, %arg5: memref<1x2048xf32, #tpu.memory_space<vmem>>, %arg6: memref<32x256xbf16, #tpu.memory_space<any>>, %arg7: memref<256x2048xbf16, #tpu.memory_space<any>>, %arg8: memref<32x256xbf16, #tpu.memory_space<vmem>>, %arg9: memref<256x256xbf16, #tpu.memory_space<vmem>>, %arg10: memref<16xf32, #tpu.memory_space<smem>>, %arg11: memref<2x1536xf32, #tpu.memory_space<vmem>>, %arg12: memref<2x1xf32, #tpu.memory_space<vmem>>, %arg13: memref<32x256xbf16, #tpu.memory_space<vmem>>, %arg14: memref<256x2048xbf16, #tpu.memory_space<vmem>>, %arg15: memref<2x!tpu.dma_semaphore, #tpu.memory_space<semaphore_mem>>) attributes {dimension_semantics = [], scalar_prefetch = 0 : i64, scratch_operands = 3 : i64, tpu.core_type = #tpu.core_type<tc>} {
    %c0_i32 = arith.constant 0 : i32
    %0 = tpu.memref_slice %arg15[%c0_i32] : memref<2x!tpu.dma_semaphore, #tpu.memory_space<semaphore_mem>> -> memref<1x!tpu.dma_semaphore, #tpu.memory_space<semaphore_mem>>
    %1 = tpu.memref_squeeze %0 : memref<1x!tpu.dma_semaphore, #tpu.memory_space<semaphore_mem>> -> memref<!tpu.dma_semaphore, #tpu.memory_space<semaphore_mem>>
    tpu.enqueue_dma source(%arg6 : memref<32x256xbf16, #tpu.memory_space<any>>) target(%arg13 : memref<32x256xbf16, #tpu.memory_space<vmem>>) target_semaphore(%1 : memref<!tpu.dma_semaphore, #tpu.memory_space<semaphore_mem>>)
    %c1_i32 = arith.constant 1 : i32
    %2 = tpu.memref_slice %arg15[%c1_i32] : memref<2x!tpu.dma_semaphore, #tpu.memory_space<semaphore_mem>> -> memref<1x!tpu.dma_semaphore, #tpu.memory_space<semaphore_mem>>
    %3 = tpu.memref_squeeze %2 : memref<1x!tpu.dma_semaphore, #tpu.memory_space<semaphore_mem>> -> memref<!tpu.dma_semaphore, #tpu.memory_space<semaphore_mem>>
    tpu.enqueue_dma source(%arg7 : memref<256x2048xbf16, #tpu.memory_space<any>>) target(%arg14 : memref<256x2048xbf16, #tpu.memory_space<vmem>>) target_semaphore(%3 : memref<!tpu.dma_semaphore, #tpu.memory_space<semaphore_mem>>)
    %c0 = arith.constant 0 : index
    %c0_0 = arith.constant 0 : index
    %4 = vector.load %arg3[%c0, %c0_0] : memref<120x32xf32, #tpu.memory_space<vmem>>, vector<8x16xf32>
    %c0_1 = arith.constant 0 : index
    %c0_2 = arith.constant 0 : index
    %5 = vector.load %arg0[%c0_1, %c0_2] : memref<16x7xf32, #tpu.memory_space<vmem>>, vector<16x5xf32>
    %6 = vector.extract_strided_slice %4 {offsets = [0, 0], sizes = [5, 16], strides = [1, 1]} : vector<8x16xf32> to vector<5x16xf32>
    %cst = arith.constant dense<0.000000e+00> : vector<16x16xf32>
    %7 = tpu.matmul %5, %6, %cst {dimension_numbers = #tpu.dot_dimension_numbers<[1], [0], [0], [1], [0, 0, 1, 1], [], []>} : vector<16x5xf32>, vector<5x16xf32>, vector<16x16xf32> -> vector<16x16xf32>
    %c0_3 = arith.constant 0 : index
    %c0_4 = arith.constant 0 : index
    %8 = vector.load %arg1[%c0_3, %c0_4] : memref<16x3xf32, #tpu.memory_space<vmem>>, vector<16x3xf32>
    %9 = vector.extract_strided_slice %4 {offsets = [5, 0], sizes = [3, 16], strides = [1, 1]} : vector<8x16xf32> to vector<3x16xf32>
    %cst_5 = arith.constant dense<0.000000e+00> : vector<16x16xf32>
    %10 = tpu.matmul %8, %9, %cst_5 {dimension_numbers = #tpu.dot_dimension_numbers<[1], [0], [0], [1], [0, 0, 1, 1], [], []>} : vector<16x3xf32>, vector<3x16xf32>, vector<16x16xf32> -> vector<16x16xf32>
    %11 = arith.addf %7, %10 : vector<16x16xf32>
    %c8 = arith.constant 8 : index
    %c0_6 = arith.constant 0 : index
    %12 = vector.load %arg3[%c8, %c0_6] : memref<120x32xf32, #tpu.memory_space<vmem>>, vector<1x16xf32>
    %13 = vector.broadcast %12 : vector<1x16xf32> to vector<16x16xf32>
    %14 = arith.addf %11, %13 : vector<16x16xf32>
    %15 = arith.mulf %14, %14 : vector<16x16xf32>
    %16 = arith.mulf %14, %15 : vector<16x16xf32>
    %cst_7 = arith.constant 4.471500e-02 : f32
    %17 = vector.broadcast %cst_7 : f32 to vector<16x16xf32>
    %18 = arith.mulf %17, %16 : vector<16x16xf32>
    %19 = arith.addf %14, %18 : vector<16x16xf32>
    %cst_8 = arith.constant 0.797884583 : f32
    %20 = vector.broadcast %cst_8 : f32 to vector<16x16xf32>
    %21 = arith.mulf %20, %19 : vector<16x16xf32>
    %22 = math.tanh %21 : vector<16x16xf32>
    %cst_9 = arith.constant 1.000000e+00 : f32
    %23 = vector.broadcast %cst_9 : f32 to vector<16x16xf32>
    %24 = arith.addf %23, %22 : vector<16x16xf32>
    %cst_10 = arith.constant 5.000000e-01 : f32
    %25 = vector.broadcast %cst_10 : f32 to vector<16x16xf32>
    %26 = arith.mulf %25, %24 : vector<16x16xf32>
    %27 = arith.mulf %14, %26 : vector<16x16xf32>
    %28 = tpu.iota {dimensions = array<i32: 0>} : vector<2x16xi32>
    %c0_11 = arith.constant 0 : index
    %c0_12 = arith.constant 0 : index
    %29 = vector.load %arg2[%c0_11, %c0_12] : memref<1x16xi32, #tpu.memory_space<vmem>>, vector<1x16xi32>
    %30 = vector.broadcast %29 : vector<1x16xi32> to vector<2x16xi32>
    %31 = arith.cmpi eq, %30, %28 : vector<2x16xi32>
    %32 = arith.extui %31 : vector<2x16xi1> to vector<2x16xi32>
    %33 = arith.sitofp %32 : vector<2x16xi32> to vector<2x16xf32>
    %cst_13 = arith.constant dense<0.000000e+00> : vector<2xf32>
    %34 = vector.multi_reduction <add>, %33, %cst_13 [1] : vector<2x16xf32> to vector<2xf32>
    %35 = vector.shape_cast %34 : vector<2xf32> to vector<2x1xf32>
    %cst_14 = arith.constant 1.000000e+00 : f32
    %36 = vector.broadcast %cst_14 : f32 to vector<2x1xf32>
    %37 = arith.maximumf %35, %36 : vector<2x1xf32>
    %38 = vector.broadcast %37 : vector<2x1xf32> to vector<2x16xf32>
    %39 = arith.divf %33, %38 : vector<2x16xf32>
    %cst_15 = arith.constant dense<0.000000e+00> : vector<2x16xf32>
    %40 = tpu.matmul %39, %27, %cst_15 {dimension_numbers = #tpu.dot_dimension_numbers<[1], [0], [0], [1], [0, 0, 1, 1], [], []>} : vector<2x16xf32>, vector<16x16xf32>, vector<2x16xf32> -> vector<2x16xf32>
    %c16 = arith.constant 16 : index
    %c0_16 = arith.constant 0 : index
    %41 = vector.load %arg3[%c16, %c0_16] : memref<120x32xf32, #tpu.memory_space<vmem>>, vector<16x32xf32>
    %cst_17 = arith.constant dense<0.000000e+00> : vector<2x32xf32>
    %42 = tpu.matmul %40, %41, %cst_17 {dimension_numbers = #tpu.dot_dimension_numbers<[1], [0], [0], [1], [0, 0, 1, 1], [], []>} : vector<2x16xf32>, vector<16x32xf32>, vector<2x32xf32> -> vector<2x32xf32>
    %c32 = arith.constant 32 : index
    %c0_18 = arith.constant 0 : index
    %43 = vector.load %arg3[%c32, %c0_18] : memref<120x32xf32, #tpu.memory_space<vmem>>, vector<1x32xf32>
    %44 = vector.broadcast %43 : vector<1x32xf32> to vector<2x32xf32>
    %45 = arith.addf %42, %44 : vector<2x32xf32>
    %46 = arith.mulf %45, %45 : vector<2x32xf32>
    %47 = arith.mulf %45, %46 : vector<2x32xf32>
    %cst_19 = arith.constant 4.471500e-02 : f32
    %48 = vector.broadcast %cst_19 : f32 to vector<2x32xf32>
    %49 = arith.mulf %48, %47 : vector<2x32xf32>
    %50 = arith.addf %45, %49 : vector<2x32xf32>
    %cst_20 = arith.constant 0.797884583 : f32
    %51 = vector.broadcast %cst_20 : f32 to vector<2x32xf32>
    %52 = arith.mulf %51, %50 : vector<2x32xf32>
    %53 = math.tanh %52 : vector<2x32xf32>
    %cst_21 = arith.constant 1.000000e+00 : f32
    %54 = vector.broadcast %cst_21 : f32 to vector<2x32xf32>
    %55 = arith.addf %54, %53 : vector<2x32xf32>
    %cst_22 = arith.constant 5.000000e-01 : f32
    %56 = vector.broadcast %cst_22 : f32 to vector<2x32xf32>
    %57 = arith.mulf %56, %55 : vector<2x32xf32>
    %58 = arith.mulf %45, %57 : vector<2x32xf32>
    %c40 = arith.constant 40 : index
    %c0_23 = arith.constant 0 : index
    %59 = vector.load %arg3[%c40, %c0_23] : memref<120x32xf32, #tpu.memory_space<vmem>>, vector<32x32xf32>
    %cst_24 = arith.constant dense<0.000000e+00> : vector<2x32xf32>
    %60 = tpu.matmul %58, %59, %cst_24 {dimension_numbers = #tpu.dot_dimension_numbers<[1], [0], [0], [1], [0, 0, 1, 1], [], []>} : vector<2x32xf32>, vector<32x32xf32>, vector<2x32xf32> -> vector<2x32xf32>
    %c72 = arith.constant 72 : index
    %c0_25 = arith.constant 0 : index
    %61 = vector.load %arg3[%c72, %c0_25] : memref<120x32xf32, #tpu.memory_space<vmem>>, vector<1x32xf32>
    %62 = vector.broadcast %61 : vector<1x32xf32> to vector<2x32xf32>
    %63 = arith.addf %60, %62 : vector<2x32xf32>
    %64 = arith.mulf %63, %63 : vector<2x32xf32>
    %65 = arith.mulf %63, %64 : vector<2x32xf32>
    %cst_26 = arith.constant 4.471500e-02 : f32
    %66 = vector.broadcast %cst_26 : f32 to vector<2x32xf32>
    %67 = arith.mulf %66, %65 : vector<2x32xf32>
    %68 = arith.addf %63, %67 : vector<2x32xf32>
    %cst_27 = arith.constant 0.797884583 : f32
    %69 = vector.broadcast %cst_27 : f32 to vector<2x32xf32>
    %70 = arith.mulf %69, %68 : vector<2x32xf32>
    %71 = math.tanh %70 : vector<2x32xf32>
    %cst_28 = arith.constant 1.000000e+00 : f32
    %72 = vector.broadcast %cst_28 : f32 to vector<2x32xf32>
    %73 = arith.addf %72, %71 : vector<2x32xf32>
    %cst_29 = arith.constant 5.000000e-01 : f32
    %74 = vector.broadcast %cst_29 : f32 to vector<2x32xf32>
    %75 = arith.mulf %74, %73 : vector<2x32xf32>
    %76 = arith.mulf %63, %75 : vector<2x32xf32>
    %c80 = arith.constant 80 : index
    %c0_30 = arith.constant 0 : index
    %77 = vector.load %arg3[%c80, %c0_30] : memref<120x32xf32, #tpu.memory_space<vmem>>, vector<32x32xf32>
    %cst_31 = arith.constant dense<0.000000e+00> : vector<2x32xf32>
    %78 = tpu.matmul %76, %77, %cst_31 {dimension_numbers = #tpu.dot_dimension_numbers<[1], [0], [0], [1], [0, 0, 1, 1], [], []>} : vector<2x32xf32>, vector<32x32xf32>, vector<2x32xf32> -> vector<2x32xf32>
    %c112 = arith.constant 112 : index
    %c0_32 = arith.constant 0 : index
    %79 = vector.load %arg3[%c112, %c0_32] : memref<120x32xf32, #tpu.memory_space<vmem>>, vector<1x32xf32>
    %80 = vector.broadcast %79 : vector<1x32xf32> to vector<2x32xf32>
    %81 = arith.addf %78, %80 : vector<2x32xf32>
    %82 = arith.truncf %81 : vector<2x32xf32> to vector<2x32xbf16>
    %c0_33 = arith.constant 0 : index
    %c0_34 = arith.constant 0 : index
    %83 = vector.load %arg8[%c0_33, %c0_34] : memref<32x256xbf16, #tpu.memory_space<vmem>>, vector<32x256xbf16>
    %cst_35 = arith.constant dense<0.000000e+00> : vector<2x256xf32>
    %84 = tpu.matmul %82, %83, %cst_35 {dimension_numbers = #tpu.dot_dimension_numbers<[1], [0], [0], [1], [0, 0, 1, 1], [], []>} : vector<2x32xbf16>, vector<32x256xbf16>, vector<2x256xf32> -> vector<2x256xf32>
    %c0_36 = arith.constant 0 : index
    %c0_37 = arith.constant 0 : index
    %85 = vector.load %arg4[%c0_36, %c0_37] : memref<9x256xf32, #tpu.memory_space<vmem>>, vector<1x256xf32>
    %86 = vector.broadcast %85 : vector<1x256xf32> to vector<2x256xf32>
    %87 = arith.addf %84, %86 : vector<2x256xf32>
    %c1 = arith.constant 1 : index
    %c0_38 = arith.constant 0 : index
    %88 = vector.load %arg4[%c1, %c0_38] : memref<9x256xf32, #tpu.memory_space<vmem>>, vector<1x256xf32>
    %c2 = arith.constant 2 : index
    %c0_39 = arith.constant 0 : index
    %89 = vector.load %arg4[%c2, %c0_39] : memref<9x256xf32, #tpu.memory_space<vmem>>, vector<1x256xf32>
    %cst_40 = arith.constant dense<0.000000e+00> : vector<2xf32>
    %90 = vector.multi_reduction <add>, %87, %cst_40 [1] : vector<2x256xf32> to vector<2xf32>
    %91 = vector.shape_cast %90 : vector<2xf32> to vector<2x1xf32>
    %cst_41 = arith.constant 2.560000e+02 : f32
    %92 = vector.broadcast %cst_41 : f32 to vector<2x1xf32>
    %93 = arith.divf %91, %92 : vector<2x1xf32>
    %94 = vector.broadcast %93 : vector<2x1xf32> to vector<2x256xf32>
    %95 = arith.subf %87, %94 : vector<2x256xf32>
    %96 = arith.mulf %95, %95 : vector<2x256xf32>
    %cst_42 = arith.constant dense<0.000000e+00> : vector<2xf32>
    %97 = vector.multi_reduction <add>, %96, %cst_42 [1] : vector<2x256xf32> to vector<2xf32>
    %98 = vector.shape_cast %97 : vector<2xf32> to vector<2x1xf32>
    %cst_43 = arith.constant 2.560000e+02 : f32
    %99 = vector.broadcast %cst_43 : f32 to vector<2x1xf32>
    %100 = arith.divf %98, %99 : vector<2x1xf32>
    %101 = vector.broadcast %93 : vector<2x1xf32> to vector<2x256xf32>
    %102 = arith.subf %87, %101 : vector<2x256xf32>
    %cst_44 = arith.constant 9.99999974E-6 : f32
    %103 = vector.broadcast %cst_44 : f32 to vector<2x1xf32>
    %104 = arith.addf %100, %103 : vector<2x1xf32>
    %105 = math.rsqrt %104 : vector<2x1xf32>
    %106 = vector.broadcast %105 : vector<2x1xf32> to vector<2x256xf32>
    %107 = arith.mulf %102, %106 : vector<2x256xf32>
    %108 = vector.broadcast %88 : vector<1x256xf32> to vector<2x256xf32>
    %109 = arith.mulf %107, %108 : vector<2x256xf32>
    %110 = vector.broadcast %89 : vector<1x256xf32> to vector<2x256xf32>
    %111 = arith.addf %109, %110 : vector<2x256xf32>
    %112 = arith.mulf %111, %111 : vector<2x256xf32>
    %113 = arith.mulf %111, %112 : vector<2x256xf32>
    %cst_45 = arith.constant 4.471500e-02 : f32
    %114 = vector.broadcast %cst_45 : f32 to vector<2x256xf32>
    %115 = arith.mulf %114, %113 : vector<2x256xf32>
    %116 = arith.addf %111, %115 : vector<2x256xf32>
    %cst_46 = arith.constant 0.797884583 : f32
    %117 = vector.broadcast %cst_46 : f32 to vector<2x256xf32>
    %118 = arith.mulf %117, %116 : vector<2x256xf32>
    %119 = math.tanh %118 : vector<2x256xf32>
    %cst_47 = arith.constant 1.000000e+00 : f32
    %120 = vector.broadcast %cst_47 : f32 to vector<2x256xf32>
    %121 = arith.addf %120, %119 : vector<2x256xf32>
    %cst_48 = arith.constant 5.000000e-01 : f32
    %122 = vector.broadcast %cst_48 : f32 to vector<2x256xf32>
    %123 = arith.mulf %122, %121 : vector<2x256xf32>
    %124 = arith.mulf %111, %123 : vector<2x256xf32>
    %125 = arith.truncf %124 : vector<2x256xf32> to vector<2x256xbf16>
    %c0_49 = arith.constant 0 : index
    %c0_50 = arith.constant 0 : index
    %126 = vector.load %arg9[%c0_49, %c0_50] : memref<256x256xbf16, #tpu.memory_space<vmem>>, vector<256x256xbf16>
    %cst_51 = arith.constant dense<0.000000e+00> : vector<2x256xf32>
    %127 = tpu.matmul %125, %126, %cst_51 {dimension_numbers = #tpu.dot_dimension_numbers<[1], [0], [0], [1], [0, 0, 1, 1], [], []>} : vector<2x256xbf16>, vector<256x256xbf16>, vector<2x256xf32> -> vector<2x256xf32>
    %c3 = arith.constant 3 : index
    %c0_52 = arith.constant 0 : index
    %128 = vector.load %arg4[%c3, %c0_52] : memref<9x256xf32, #tpu.memory_space<vmem>>, vector<1x256xf32>
    %129 = vector.broadcast %128 : vector<1x256xf32> to vector<2x256xf32>
    %130 = arith.addf %127, %129 : vector<2x256xf32>
    %c4 = arith.constant 4 : index
    %c0_53 = arith.constant 0 : index
    %131 = vector.load %arg4[%c4, %c0_53] : memref<9x256xf32, #tpu.memory_space<vmem>>, vector<1x256xf32>
    %c5 = arith.constant 5 : index
    %c0_54 = arith.constant 0 : index
    %132 = vector.load %arg4[%c5, %c0_54] : memref<9x256xf32, #tpu.memory_space<vmem>>, vector<1x256xf32>
    %cst_55 = arith.constant dense<0.000000e+00> : vector<2xf32>
    %133 = vector.multi_reduction <add>, %130, %cst_55 [1] : vector<2x256xf32> to vector<2xf32>
    %134 = vector.shape_cast %133 : vector<2xf32> to vector<2x1xf32>
    %cst_56 = arith.constant 2.560000e+02 : f32
    %135 = vector.broadcast %cst_56 : f32 to vector<2x1xf32>
    %136 = arith.divf %134, %135 : vector<2x1xf32>
    %137 = vector.broadcast %136 : vector<2x1xf32> to vector<2x256xf32>
    %138 = arith.subf %130, %137 : vector<2x256xf32>
    %139 = arith.mulf %138, %138 : vector<2x256xf32>
    %cst_57 = arith.constant dense<0.000000e+00> : vector<2xf32>
    %140 = vector.multi_reduction <add>, %139, %cst_57 [1] : vector<2x256xf32> to vector<2xf32>
    %141 = vector.shape_cast %140 : vector<2xf32> to vector<2x1xf32>
    %cst_58 = arith.constant 2.560000e+02 : f32
    %142 = vector.broadcast %cst_58 : f32 to vector<2x1xf32>
    %143 = arith.divf %141, %142 : vector<2x1xf32>
    %144 = vector.broadcast %136 : vector<2x1xf32> to vector<2x256xf32>
    %145 = arith.subf %130, %144 : vector<2x256xf32>
    %cst_59 = arith.constant 9.99999974E-6 : f32
    %146 = vector.broadcast %cst_59 : f32 to vector<2x1xf32>
    %147 = arith.addf %143, %146 : vector<2x1xf32>
    %148 = math.rsqrt %147 : vector<2x1xf32>
    %149 = vector.broadcast %148 : vector<2x1xf32> to vector<2x256xf32>
    %150 = arith.mulf %145, %149 : vector<2x256xf32>
    %151 = vector.broadcast %131 : vector<1x256xf32> to vector<2x256xf32>
    %152 = arith.mulf %150, %151 : vector<2x256xf32>
    %153 = vector.broadcast %132 : vector<1x256xf32> to vector<2x256xf32>
    %154 = arith.addf %152, %153 : vector<2x256xf32>
    %155 = arith.mulf %154, %154 : vector<2x256xf32>
    %156 = arith.mulf %154, %155 : vector<2x256xf32>
    %cst_60 = arith.constant 4.471500e-02 : f32
    %157 = vector.broadcast %cst_60 : f32 to vector<2x256xf32>
    %158 = arith.mulf %157, %156 : vector<2x256xf32>
    %159 = arith.addf %154, %158 : vector<2x256xf32>
    %cst_61 = arith.constant 0.797884583 : f32
    %160 = vector.broadcast %cst_61 : f32 to vector<2x256xf32>
    %161 = arith.mulf %160, %159 : vector<2x256xf32>
    %162 = math.tanh %161 : vector<2x256xf32>
    %cst_62 = arith.constant 1.000000e+00 : f32
    %163 = vector.broadcast %cst_62 : f32 to vector<2x256xf32>
    %164 = arith.addf %163, %162 : vector<2x256xf32>
    %cst_63 = arith.constant 5.000000e-01 : f32
    %165 = vector.broadcast %cst_63 : f32 to vector<2x256xf32>
    %166 = arith.mulf %165, %164 : vector<2x256xf32>
    %167 = arith.mulf %154, %166 : vector<2x256xf32>
    %c6 = arith.constant 6 : index
    %c0_64 = arith.constant 0 : index
    %168 = vector.load %arg4[%c6, %c0_64] : memref<9x256xf32, #tpu.memory_space<vmem>>, vector<1x256xf32>
    %169 = vector.broadcast %168 : vector<1x256xf32> to vector<2x256xf32>
    %170 = arith.mulf %167, %169 : vector<2x256xf32>
    %cst_65 = arith.constant dense<0.000000e+00> : vector<2xf32>
    %171 = vector.multi_reduction <add>, %170, %cst_65 [1] : vector<2x256xf32> to vector<2xf32>
    %172 = vector.shape_cast %171 : vector<2xf32> to vector<2x1xf32>
    %c7 = arith.constant 7 : index
    %c0_66 = arith.constant 0 : index
    %173 = vector.load %arg4[%c7, %c0_66] : memref<9x256xf32, #tpu.memory_space<vmem>>, vector<1x1xf32>
    %174 = vector.broadcast %173 : vector<1x1xf32> to vector<2x1xf32>
    %175 = arith.addf %172, %174 : vector<2x1xf32>
    %c0_67 = arith.constant 0 : index
    %c0_68 = arith.constant 0 : index
    %176 = vector.load %arg12[%c0_67, %c0_68] : memref<2x1xf32, #tpu.memory_space<vmem>>, vector<2x1xf32>
    tpu.vector_store %arg12[%c0_67, %c0_68], %175 {strides = array<i32>} : memref<2x1xf32, #tpu.memory_space<vmem>>, vector<2x1xf32>,
    %c0_i32_69 = arith.constant 0 : i32
    %177 = tpu.memref_slice %arg15[%c0_i32_69] : memref<2x!tpu.dma_semaphore, #tpu.memory_space<semaphore_mem>> -> memref<1x!tpu.dma_semaphore, #tpu.memory_space<semaphore_mem>>
    %178 = tpu.memref_squeeze %177 : memref<1x!tpu.dma_semaphore, #tpu.memory_space<semaphore_mem>> -> memref<!tpu.dma_semaphore, #tpu.memory_space<semaphore_mem>>
    tpu.wait_dma2 semaphore(%178 : memref<!tpu.dma_semaphore, #tpu.memory_space<semaphore_mem>>) src(%arg6 : memref<32x256xbf16, #tpu.memory_space<any>>) dst(%arg13 : memref<32x256xbf16, #tpu.memory_space<vmem>>)
    %179 = arith.truncf %81 : vector<2x32xf32> to vector<2x32xbf16>
    %c0_70 = arith.constant 0 : index
    %c0_71 = arith.constant 0 : index
    %180 = vector.load %arg13[%c0_70, %c0_71] : memref<32x256xbf16, #tpu.memory_space<vmem>>, vector<32x256xbf16>
    %cst_72 = arith.constant dense<0.000000e+00> : vector<2x256xf32>
    %181 = tpu.matmul %179, %180, %cst_72 {dimension_numbers = #tpu.dot_dimension_numbers<[1], [0], [0], [1], [0, 0, 1, 1], [], []>} : vector<2x32xbf16>, vector<32x256xbf16>, vector<2x256xf32> -> vector<2x256xf32>
    %c8_73 = arith.constant 8 : index
    %c0_74 = arith.constant 0 : index
    %182 = vector.load %arg4[%c8_73, %c0_74] : memref<9x256xf32, #tpu.memory_space<vmem>>, vector<1x256xf32>
    %183 = vector.broadcast %182 : vector<1x256xf32> to vector<2x256xf32>
    %184 = arith.addf %181, %183 : vector<2x256xf32>
    %cst_75 = arith.constant 0.000000e+00 : f32
    %185 = vector.broadcast %cst_75 : f32 to vector<2x256xf32>
    %186 = arith.maximumf %184, %185 : vector<2x256xf32>
    %c1_i32_76 = arith.constant 1 : i32
    %187 = tpu.memref_slice %arg15[%c1_i32_76] : memref<2x!tpu.dma_semaphore, #tpu.memory_space<semaphore_mem>> -> memref<1x!tpu.dma_semaphore, #tpu.memory_space<semaphore_mem>>
    %188 = tpu.memref_squeeze %187 : memref<1x!tpu.dma_semaphore, #tpu.memory_space<semaphore_mem>> -> memref<!tpu.dma_semaphore, #tpu.memory_space<semaphore_mem>>
    tpu.wait_dma2 semaphore(%188 : memref<!tpu.dma_semaphore, #tpu.memory_space<semaphore_mem>>) src(%arg7 : memref<256x2048xbf16, #tpu.memory_space<any>>) dst(%arg14 : memref<256x2048xbf16, #tpu.memory_space<vmem>>)
    %189 = arith.truncf %186 : vector<2x256xf32> to vector<2x256xbf16>
    %c0_77 = arith.constant 0 : index
    %c0_78 = arith.constant 0 : index
    %190 = vector.load %arg14[%c0_77, %c0_78] : memref<256x2048xbf16, #tpu.memory_space<vmem>>, vector<256x2048xbf16>
    %cst_79 = arith.constant dense<0.000000e+00> : vector<2x2048xf32>
    %191 = tpu.matmul %189, %190, %cst_79 {dimension_numbers = #tpu.dot_dimension_numbers<[1], [0], [0], [1], [0, 0, 1, 1], [], []>} : vector<2x256xbf16>, vector<256x2048xbf16>, vector<2x2048xf32> -> vector<2x2048xf32>
    %c0_80 = arith.constant 0 : index
    %c0_81 = arith.constant 0 : index
    %192 = vector.load %arg5[%c0_80, %c0_81] : memref<1x2048xf32, #tpu.memory_space<vmem>>, vector<1x2048xf32>
    %193 = vector.broadcast %192 : vector<1x2048xf32> to vector<2x2048xf32>
    %194 = arith.addf %191, %193 : vector<2x2048xf32>
    %cst_82 = arith.constant 0.000000e+00 : f32
    %195 = vector.broadcast %cst_82 : f32 to vector<2x2048xf32>
    %196 = arith.maximumf %194, %195 : vector<2x2048xf32>
    %c12 = arith.constant 12 : index
    %197 = memref.load %arg10[%c12] : memref<16xf32, #tpu.memory_space<smem>>
    %c0_83 = arith.constant 0 : index
    %198 = memref.load %arg10[%c0_83] : memref<16xf32, #tpu.memory_space<smem>>
    %199 = vector.extract_strided_slice %196 {offsets = [0, 0], sizes = [2, 512], strides = [1, 1]} : vector<2x2048xf32> to vector<2x512xf32>
    %200 = vector.broadcast %198 : f32 to vector<2x512xf32>
    %201 = arith.mulf %200, %199 : vector<2x512xf32>
    %202 = vector.broadcast %197 : f32 to vector<2x512xf32>
    %203 = arith.addf %202, %201 : vector<2x512xf32>
    %c1_84 = arith.constant 1 : index
    %204 = memref.load %arg10[%c1_84] : memref<16xf32, #tpu.memory_space<smem>>
    %205 = vector.extract_strided_slice %196 {offsets = [0, 512], sizes = [2, 512], strides = [1, 1]} : vector<2x2048xf32> to vector<2x512xf32>
    %206 = vector.broadcast %204 : f32 to vector<2x512xf32>
    %207 = arith.mulf %206, %205 : vector<2x512xf32>
    %208 = arith.addf %203, %207 : vector<2x512xf32>
    %c2_85 = arith.constant 2 : index
    %209 = memref.load %arg10[%c2_85] : memref<16xf32, #tpu.memory_space<smem>>
    %210 = vector.extract_strided_slice %196 {offsets = [0, 1024], sizes = [2, 512], strides = [1, 1]} : vector<2x2048xf32> to vector<2x512xf32>
    %211 = vector.broadcast %209 : f32 to vector<2x512xf32>
    %212 = arith.mulf %211, %210 : vector<2x512xf32>
    %213 = arith.addf %208, %212 : vector<2x512xf32>
    %c3_86 = arith.constant 3 : index
    %214 = memref.load %arg10[%c3_86] : memref<16xf32, #tpu.memory_space<smem>>
    %215 = vector.extract_strided_slice %196 {offsets = [0, 1536], sizes = [2, 512], strides = [1, 1]} : vector<2x2048xf32> to vector<2x512xf32>
    %216 = vector.broadcast %214 : f32 to vector<2x512xf32>
    %217 = arith.mulf %216, %215 : vector<2x512xf32>
    %218 = arith.addf %213, %217 : vector<2x512xf32>
    %c0_87 = arith.constant 0 : index
    %c0_88 = arith.constant 0 : index
    %219 = vector.load %arg11[%c0_87, %c0_88] : memref<2x1536xf32, #tpu.memory_space<vmem>>, vector<2x512xf32>
    tpu.vector_store %arg11[%c0_87, %c0_88], %218 {strides = array<i32>} : memref<2x1536xf32, #tpu.memory_space<vmem>>, vector<2x512xf32>,
    %c13 = arith.constant 13 : index
    %220 = memref.load %arg10[%c13] : memref<16xf32, #tpu.memory_space<smem>>
    %c4_89 = arith.constant 4 : index
    %221 = memref.load %arg10[%c4_89] : memref<16xf32, #tpu.memory_space<smem>>
    %222 = vector.extract_strided_slice %196 {offsets = [0, 0], sizes = [2, 512], strides = [1, 1]} : vector<2x2048xf32> to vector<2x512xf32>
    %223 = vector.broadcast %221 : f32 to vector<2x512xf32>
    %224 = arith.mulf %223, %222 : vector<2x512xf32>
    %225 = vector.broadcast %220 : f32 to vector<2x512xf32>
    %226 = arith.addf %225, %224 : vector<2x512xf32>
    %c5_90 = arith.constant 5 : index
    %227 = memref.load %arg10[%c5_90] : memref<16xf32, #tpu.memory_space<smem>>
    %228 = vector.extract_strided_slice %196 {offsets = [0, 512], sizes = [2, 512], strides = [1, 1]} : vector<2x2048xf32> to vector<2x512xf32>
    %229 = vector.broadcast %227 : f32 to vector<2x512xf32>
    %230 = arith.mulf %229, %228 : vector<2x512xf32>
    %231 = arith.addf %226, %230 : vector<2x512xf32>
    %c6_91 = arith.constant 6 : index
    %232 = memref.load %arg10[%c6_91] : memref<16xf32, #tpu.memory_space<smem>>
    %233 = vector.extract_strided_slice %196 {offsets = [0, 1024], sizes = [2, 512], strides = [1, 1]} : vector<2x2048xf32> to vector<2x512xf32>
    %234 = vector.broadcast %232 : f32 to vector<2x512xf32>
    %235 = arith.mulf %234, %233 : vector<2x512xf32>
    %236 = arith.addf %231, %235 : vector<2x512xf32>
    %c7_92 = arith.constant 7 : index
    %237 = memref.load %arg10[%c7_92] : memref<16xf32, #tpu.memory_space<smem>>
    %238 = vector.extract_strided_slice %196 {offsets = [0, 1536], sizes = [2, 512], strides = [1, 1]} : vector<2x2048xf32> to vector<2x512xf32>
    %239 = vector.broadcast %237 : f32 to vector<2x512xf32>
    %240 = arith.mulf %239, %238 : vector<2x512xf32>
    %241 = arith.addf %236, %240 : vector<2x512xf32>
    %c0_93 = arith.constant 0 : index
    %c512 = arith.constant 512 : index
    %242 = vector.load %arg11[%c0_93, %c512] : memref<2x1536xf32, #tpu.memory_space<vmem>>, vector<2x512xf32>
    tpu.vector_store %arg11[%c0_93, %c512], %241 {strides = array<i32>} : memref<2x1536xf32, #tpu.memory_space<vmem>>, vector<2x512xf32>,
    %c14 = arith.constant 14 : index
    %243 = memref.load %arg10[%c14] : memref<16xf32, #tpu.memory_space<smem>>
    %c8_94 = arith.constant 8 : index
    %244 = memref.load %arg10[%c8_94] : memref<16xf32, #tpu.memory_space<smem>>
    %245 = vector.extract_strided_slice %196 {offsets = [0, 0], sizes = [2, 512], strides = [1, 1]} : vector<2x2048xf32> to vector<2x512xf32>
    %246 = vector.broadcast %244 : f32 to vector<2x512xf32>
    %247 = arith.mulf %246, %245 : vector<2x512xf32>
    %248 = vector.broadcast %243 : f32 to vector<2x512xf32>
    %249 = arith.addf %248, %247 : vector<2x512xf32>
    %c9 = arith.constant 9 : index
    %250 = memref.load %arg10[%c9] : memref<16xf32, #tpu.memory_space<smem>>
    %251 = vector.extract_strided_slice %196 {offsets = [0, 512], sizes = [2, 512], strides = [1, 1]} : vector<2x2048xf32> to vector<2x512xf32>
    %252 = vector.broadcast %250 : f32 to vector<2x512xf32>
    %253 = arith.mulf %252, %251 : vector<2x512xf32>
    %254 = arith.addf %249, %253 : vector<2x512xf32>
    %c10 = arith.constant 10 : index
    %255 = memref.load %arg10[%c10] : memref<16xf32, #tpu.memory_space<smem>>
    %256 = vector.extract_strided_slice %196 {offsets = [0, 1024], sizes = [2, 512], strides = [1, 1]} : vector<2x2048xf32> to vector<2x512xf32>
    %257 = vector.broadcast %255 : f32 to vector<2x512xf32>
    %258 = arith.mulf %257, %256 : vector<2x512xf32>
    %259 = arith.addf %254, %258 : vector<2x512xf32>
    %c11 = arith.constant 11 : index
    %260 = memref.load %arg10[%c11] : memref<16xf32, #tpu.memory_space<smem>>
    %261 = vector.extract_strided_slice %196 {offsets = [0, 1536], sizes = [2, 512], strides = [1, 1]} : vector<2x2048xf32> to vector<2x512xf32>
    %262 = vector.broadcast %260 : f32 to vector<2x512xf32>
    %263 = arith.mulf %262, %261 : vector<2x512xf32>
    %264 = arith.addf %259, %263 : vector<2x512xf32>
    %c0_95 = arith.constant 0 : index
    %c1024 = arith.constant 1024 : index
    %265 = vector.load %arg11[%c0_95, %c1024] : memref<2x1536xf32, #tpu.memory_space<vmem>>, vector<2x512xf32>
    tpu.vector_store %arg11[%c0_95, %c1024], %264 {strides = array<i32>} : memref<2x1536xf32, #tpu.memory_space<vmem>>, vector<2x512xf32>,
    return
  }
}

</mosaic_0001>

<llo_original>
// kernel: molecule_autoencoder_forward.1
$region0: #{molecule_autoencoder_forward.1}
  #allocation0 [shape = 'u32[]', space=smem, size = 0x4, offset = 0x4, fixed_abs, tag = 'smem constant byte address 0x4 - core index']
  #allocation1 [shape = 'u32[144,128]{1,0:T(1,128)}', space=vmem, size = 0x12000, scoped, tag = 'internal scratch']
  #allocation2 [shape = 'bf16[32,256]{1,0:T(16,128)(2,1)}', space=vmem, size = 0x4000, scoped, tag = 'scratch operand']
  #allocation3 [shape = 'bf16[256,2048]{1,0:T(16,128)(2,1)}', space=vmem, size = 0x100000, scoped, tag = 'scratch operand']
  #allocation4 [shape = 's32[2]{0}', space=sflag, size = 0x8, scoped, tag = 'scratch operand']
  #allocation9 [shape = 's32[]', space=sflag, size = 0x4, offset = 0, fixed_abs, tag = 'sflag constant byte address 0x0 - dummy sync flag']
  #allocation10 [shape = 's32[]', space=sflag, size = 0x4, offset = 0, fixed_abs, tag = 'sflag constant byte address 0x0 - dummy sync flag']
  %s0 = inlined_call_operand.vmem [shape: f32[16,7], index: 0, kind: input, shape index: {}]
  %s1 = inlined_call_operand.vmem [shape: f32[16,3], index: 1, kind: input, shape index: {}]
  %s2 = inlined_call_operand.vmem [shape: s32[1,16], index: 2, kind: input, shape index: {}]
  %s3 = inlined_call_operand.vmem [shape: f32[120,32], index: 3, kind: input, shape index: {}]
  %s4 = inlined_call_operand.vmem [shape: f32[9,256], index: 4, kind: input, shape index: {}]
  %s5 = inlined_call_operand.vmem [shape: f32[1,2048], index: 5, kind: input, shape index: {}]
  %s6 = inlined_call_operand.vmem [shape: bf16[32,256], index: 6, kind: input, shape index: {}]
  %s7 = inlined_call_operand.hbm [shape: bf16[256,2048], index: 7, kind: input, shape index: {}]
  %s8 = inlined_call_operand.vmem [shape: bf16[32,256], index: 8, kind: input, shape index: {}]
  %s9 = inlined_call_operand.hbm [shape: bf16[256,256], index: 9, kind: input, shape index: {}]
  %s10 = inlined_call_operand.vmem [shape: f32[16], index: 10, kind: input, shape index: {}]
  %s11 = inlined_call_operand.vmem [shape: f32[2,1536], index: 11, kind: output, shape index: {0}]
  %s12 = inlined_call_operand.vmem [shape: f32[2,1], index: 12, kind: output, shape index: {1}]
  %13 = xla_tuple %s11, %s12
  %s14 = sld [smem:[#allocation0]]
  $region99: #{molecule_autoencoder_forward.1} parent=0
    _
  %s16 = ssub.s32 1, %s14
  %s17 = scalar_select 0, %s16, %s14
  $region1: #{molecule_autoencoder_forward.1} parent=0
    #allocation5 [shape = 'u8[131072]{0}', space=vmem, size = 0x20000, scoped, tag = 'input window, operand 9, single buffered']
    #allocation6 [shape = 's32[1]{0}', space=sflag, size = 0x4, scoped, tag = 'scoped memory for molecule_autoencoder_forward.1']
    #allocation7 [shape = 's32[1]{0}', space=sflag, size = 0x4, scoped, tag = 'scoped memory for molecule_autoencoder_forward.1']
    #allocation8 [shape = 'u8[512]{0}', space=smem, size = 0x200, scoped, tag = 'input window, operand 10, single buffered']
    #allocation11 [shape = 'u32[9]{0}', space=smem, size = 0x24, scoped, tag = 'DMA stride descriptor']
    %18 = vsyncpa [#allocation6], 0
    %19 = vsyncpa [#allocation7], 0
    // Predicated region
    $region2: #{molecule_autoencoder_forward.1} parent=1 // pred_check
      _
    $region3: #{molecule_autoencoder_forward.1} parent=1 // pred_check_branch
      %21 = sbr.rel (0) target = $region5
    $region4: #{molecule_autoencoder_forward.1} parent=1 // pred_region
      _
    $region5: #{molecule_autoencoder_forward.1} parent=1 // pred_fallthru
      _
    // Predicated region
    $region6: #{molecule_autoencoder_forward.1} parent=1 // pred_check
      _
    $region7: #{molecule_autoencoder_forward.1} parent=1 // pred_check_branch
      %23 = sbr.rel (0) target = $region9
    $region8: #{molecule_autoencoder_forward.1} parent=1 // pred_region
      _
    $region9: #{molecule_autoencoder_forward.1} parent=1 // pred_fallthru
      _
    // Predicated region
    $region10: #{molecule_autoencoder_forward.1} parent=1 // pred_check
      _
    $region11: #{molecule_autoencoder_forward.1} parent=1 // pred_check_branch
      %25 = sbr.rel (0) target = $region13
    $region12: #{molecule_autoencoder_forward.1} parent=1 // pred_region
      _
    $region13: #{molecule_autoencoder_forward.1} parent=1 // pred_fallthru
      _
    // Predicated region
    $region14: #{molecule_autoencoder_forward.1} parent=1 // pred_check
      _
    $region15: #{molecule_autoencoder_forward.1} parent=1 // pred_check_branch
      %27 = sbr.rel (0) target = $region17
    $region16: #{molecule_autoencoder_forward.1} parent=1 // pred_region
      _
    $region17: #{molecule_autoencoder_forward.1} parent=1 // pred_fallthru
      _
    // Predicated region
    $region18: #{molecule_autoencoder_forward.1} parent=1 // pred_check
      _
    $region19: #{molecule_autoencoder_forward.1} parent=1 // pred_check_branch
      %29 = sbr.rel (0) target = $region21
    $region20: #{molecule_autoencoder_forward.1} parent=1 // pred_region
      _
    $region21: #{molecule_autoencoder_forward.1} parent=1 // pred_fallthru
      _
    // Predicated region
    $region22: #{molecule_autoencoder_forward.1} parent=1 // pred_check
      _
    $region23: #{molecule_autoencoder_forward.1} parent=1 // pred_check_branch
      %31 = sbr.rel (0) target = $region25
    $region24: #{molecule_autoencoder_forward.1} parent=1 // pred_region
      _
    $region25: #{molecule_autoencoder_forward.1} parent=1 // pred_fallthru
      _
    // Predicated region
    $region26: #{molecule_autoencoder_forward.1} parent=1 // pred_check
      _
    $region27: #{molecule_autoencoder_forward.1} parent=1 // pred_check_branch
      %33 = sbr.rel (0) target = $region29
    $region28: #{molecule_autoencoder_forward.1} parent=1 // pred_region
      _
    $region29: #{molecule_autoencoder_forward.1} parent=1 // pred_fallthru
      _
    // Predicated region
    $region30: #{molecule_autoencoder_forward.1} parent=1 // pred_check
      _
    $region31: #{molecule_autoencoder_forward.1} parent=1 // pred_check_branch
      %35 = sbr.rel (0) target = $region33
    $region32: #{molecule_autoencoder_forward.1} parent=1 // pred_region
      %s37 = ssub.s32 4096, 4096
      %38 = vsyncadd [#allocation6], %s37
      %s39 = sshll.u32 [#allocation5], 4
      %s40 = int_to_ptr.vmem [resolvable:$true] %s39
      %45 = dma.hbm_to_vmem [thread:$0]  %s9, 4096, %s40, [#allocation6], 128, 128, 8
    $region33: #{molecule_autoencoder_forward.1} parent=1 // pred_fallthru
      _
    // Predicated region
    $region34: #{molecule_autoencoder_forward.1} parent=1 // pred_check
      _
    $region35: #{molecule_autoencoder_forward.1} parent=1 // pred_check_branch
      %47 = sbr.rel (0) target = $region37
    $region36: #{molecule_autoencoder_forward.1} parent=1 // pred_region
      %s49 = ssub.s32 16, 16
      %50 = vsyncadd [#allocation7], %s49
      %s52 = sshll.u32 %s10, 4
      %s53 = int_to_ptr.vmem [resolvable:$true] %s52
      %55 = dma.vmem_to_smem %s53, 16, [#allocation8], [#allocation7]
    $region37: #{molecule_autoencoder_forward.1} parent=1 // pred_fallthru
      _
    // Predicated region
    $region38: #{molecule_autoencoder_forward.1} parent=1 // pred_check
      _
    $region39: #{molecule_autoencoder_forward.1} parent=1 // pred_check_branch
      %57 = sbr.rel (0) target = $region41
    $region40: #{molecule_autoencoder_forward.1} parent=1 // pred_region
      %58 = dma.done [#allocation6], 4096
    $region41: #{molecule_autoencoder_forward.1} parent=1 // pred_fallthru
      _
    // Predicated region
    $region42: #{molecule_autoencoder_forward.1} parent=1 // pred_check
      _
    $region43: #{molecule_autoencoder_forward.1} parent=1 // pred_check_branch
      %60 = sbr.rel (0) target = $region45
    $region44: #{molecule_autoencoder_forward.1} parent=1 // pred_region
      %61 = dma.done [#allocation7], 16
    $region45: #{molecule_autoencoder_forward.1} parent=1 // pred_fallthru
      _
    %62 = sfence
    %p65 = scmp.lt.u32.totalorder 4, 8
    %p66 = pneg %p65
    // Predicated region
    $region46: #{molecule_autoencoder_forward.1} parent=1 // pred_check
      _
    $region47: #{molecule_autoencoder_forward.1} parent=1 // pred_check_branch
      %68 = sbr.rel (%p65) target = $region49
    $region48: #{molecule_autoencoder_forward.1} parent=1 // pred_region
      %s97 = sand.u32 4, 7
      %p98 = scmp.eq.s32.totalorder %s97, 0
      %p99 = pneg %p98
      // Predicated region
      $region61: #{molecule_autoencoder_forward.1} parent=48 // pred_check
        _
      $region62: #{molecule_autoencoder_forward.1} parent=48 // pred_check_branch
        %101 = sbr.rel (%p98) target = $region64
      $region63: #{molecule_autoencoder_forward.1} parent=48 // pred_region
        %s102 = sand.u32 4, 7
        %s103 = ssub.s32 4, %s102
        %s104 = scalar_lea.vmem %s6, %s103
        %s105 = ssub.s32 4, %s102
        %s106 = scalar_lea.vmem [#allocation2], %s105
        loop: start=0, step=1, limit=1
        $region65: #{molecule_autoencoder_forward.1} parent=63 // loop_pre_header
          _
        $region66: #{molecule_autoencoder_forward.1} parent=63 // loop_header
          %s108 = sphi 0, %s112
          %p109 = scmp.ge.s32.totalorder %s108, 1
          %s113 = sphi %s6, %s6
          %s114 = sphi [#allocation2], [#allocation2]
        $region67: #{molecule_autoencoder_forward.1} parent=63 // loop_header_branch
          %111 = sbr.rel (%p109) target = $region71
        $region68: #{molecule_autoencoder_forward.1} parent=63 // loop_body
          _
        $region69: #{molecule_autoencoder_forward.1} parent=63 // loop_footer
          %s112 = sadd.s32 1, %s108
        $region70: #{molecule_autoencoder_forward.1} parent=63 // loop_footer_branch
          %107 = sbr.rel target = $region66
        $region71: #{molecule_autoencoder_forward.1} parent=63 // loop_exit
          _
        %s115 = sshllo.u32 0, %s102
        loop: start=0, step=1, limit=1
        $region72: #{molecule_autoencoder_forward.1} parent=63 // loop_pre_header
          _
        $region73: #{molecule_autoencoder_forward.1} parent=63 // loop_header
          %s117 = sphi 0, %s121
          %p118 = scmp.ge.s32.totalorder %s117, 1
          %s122 = sphi %s104, %s104
          %s123 = sphi %s106, %s106
        $region74: #{molecule_autoencoder_forward.1} parent=63 // loop_header_branch
          %120 = sbr.rel (%p118) target = $region78
        $region75: #{molecule_autoencoder_forward.1} parent=63 // loop_body
          %v124 = vld [vmem:[%s122] sm:%s115]
          %125 = vst [vmem:[%s123] sm:%s115] %v124
          %v126 = vld [vmem:[%s122 + $0x8] sm:%s115]
          %127 = vst [vmem:[%s123 + $0x4] sm:%s115] %v126
          %v128 = vld [vmem:[%s122 + $0x4] sm:%s115]
          %129 = vst [vmem:[%s123 + $0x8] sm:%s115] %v128
          %v130 = vld [vmem:[%s122 + $0xc] sm:%s115]
          %131 = vst [vmem:[%s123 + $0xc] sm:%s115] %v130
          %v132 = vld [vmem:[%s122 + $0x10] sm:%s115]
          %133 = vst [vmem:[%s123 + $0x10] sm:%s115] %v132
          %v134 = vld [vmem:[%s122 + $0x18] sm:%s115]
          %135 = vst [vmem:[%s123 + $0x14] sm:%s115] %v134
          %v136 = vld [vmem:[%s122 + $0x14] sm:%s115]
          %137 = vst [vmem:[%s123 + $0x18] sm:%s115] %v136
          %v138 = vld [vmem:[%s122 + $0x1c] sm:%s115]
          %139 = vst [vmem:[%s123 + $0x1c] sm:%s115] %v138
        $region76: #{molecule_autoencoder_forward.1} parent=63 // loop_footer
          %s121 = sadd.s32 1, %s117
        $region77: #{molecule_autoencoder_forward.1} parent=63 // loop_footer_branch
          %116 = sbr.rel target = $region73
        $region78: #{molecule_autoencoder_forward.1} parent=63 // loop_exit
          _
      $region64: #{molecule_autoencoder_forward.1} parent=48 // pred_fallthru
        _
    $region49: #{molecule_autoencoder_forward.1} parent=1 // pred_fallthru
      _
    // Predicated region
    $region50: #{molecule_autoencoder_forward.1} parent=1 // pred_check
      %p69 = pneg %p65
    $region51: #{molecule_autoencoder_forward.1} parent=1 // pred_check_branch
      %71 = sbr.rel (%p69) target = $region53
    $region52: #{molecule_autoencoder_forward.1} parent=1 // pred_region
      %s72 = sshllo.u32 0, 4
      loop: start=0, step=1, limit=1
      $region54: #{molecule_autoencoder_forward.1} parent=52 // loop_pre_header
        _
      $region55: #{molecule_autoencoder_forward.1} parent=52 // loop_header
        %s74 = sphi 0, %s78
        %p75 = scmp.ge.s32.totalorder %s74, 1
        %s79 = sphi %s6, %s6
        %s80 = sphi [#allocation2], [#allocation2]
      $region56: #{molecule_autoencoder_forward.1} parent=52 // loop_header_branch
        %77 = sbr.rel (%p75) target = $region60
      $region57: #{molecule_autoencoder_forward.1} parent=52 // loop_body
        %v81 = vld [vmem:[%s79] sm:%s72]
        %82 = vst [vmem:[%s80] sm:%s72] %v81
        %v83 = vld [vmem:[%s79 + $0x8] sm:%s72]
        %84 = vst [vmem:[%s80 + $0x4] sm:%s72] %v83
        %v85 = vld [vmem:[%s79 + $0x4] sm:%s72]
        %86 = vst [vmem:[%s80 + $0x8] sm:%s72] %v85
        %v87 = vld [vmem:[%s79 + $0xc] sm:%s72]
        %88 = vst [vmem:[%s80 + $0xc] sm:%s72] %v87
        %v89 = vld [vmem:[%s79 + $0x10] sm:%s72]
        %90 = vst [vmem:[%s80 + $0x10] sm:%s72] %v89
        %v91 = vld [vmem:[%s79 + $0x18] sm:%s72]
        %92 = vst [vmem:[%s80 + $0x14] sm:%s72] %v91
        %v93 = vld [vmem:[%s79 + $0x14] sm:%s72]
        %94 = vst [vmem:[%s80 + $0x18] sm:%s72] %v93
        %v95 = vld [vmem:[%s79 + $0x1c] sm:%s72]
        %96 = vst [vmem:[%s80 + $0x1c] sm:%s72] %v95
      $region58: #{molecule_autoencoder_forward.1} parent=52 // loop_footer
        %s78 = sadd.s32 1, %s74
      $region59: #{molecule_autoencoder_forward.1} parent=52 // loop_footer_branch
        %73 = sbr.rel target = $region55
      $region60: #{molecule_autoencoder_forward.1} parent=52 // loop_exit
        _
    $region53: #{molecule_autoencoder_forward.1} parent=1 // pred_fallthru
      _
    // Predicated region
    $region79: #{molecule_autoencoder_forward.1} parent=1 // pred_check
      _
    $region80: #{molecule_autoencoder_forward.1} parent=1 // pred_check_branch
      %142 = sbr.rel (0) target = $region82
    $region81: #{molecule_autoencoder_forward.1} parent=1 // pred_region
      %143 = vsyncadd [#allocation4], 512
    $region82: #{molecule_autoencoder_forward.1} parent=1 // pred_fallthru
      _
    %s144 = scalar_lea.sflag [#allocation4], 1
    %s146 = sshll.u32 1, 14
    %s147 = sxor.u32 4294967295, %s146
    %s149 = sld [smem:[#allocation0]]
    %s150 = sadd.s32 2, %s149
    %s152 = sshll.u32 7, 26
    %s153 = sxor.u32 4294967295, %s152
    %s154 = sand.u32 0, %s153
    %s155 = sshll.u32 %s150, 26
    %s156 = sor.u32 %s154, %s155
    %s157 = sshll.u32 [#allocation3], 4
    %s158 = int_to_ptr.vmem [resolvable:$true] %s157
    %161 = sst [smem:[#allocation11]] 2048
    %s162 = scalar_lea.smem [#allocation11], 1
    %163 = sst [smem:[%s162]] 2048
    %s164 = scalar_lea.smem [#allocation11], 2
    %165 = sst [smem:[%s164]] 16
    %s166 = scalar_lea.smem [#allocation11], 3
    %167 = sst [smem:[%s166]] 64
    %s168 = scalar_lea.smem [#allocation11], 4
    %169 = sst [smem:[%s168]] 128
    %s170 = scalar_lea.smem [#allocation11], 5
    %171 = sst [smem:[%s170]] 2
    %s172 = scalar_lea.smem [#allocation11], 6
    %173 = sst [smem:[%s172]] 1024
    %s174 = scalar_lea.smem [#allocation11], 7
    %175 = sst [smem:[%s174]] 64
    %s176 = scalar_lea.smem [#allocation11], 8
    %177 = sst [smem:[%s176]] 4
    %179 = dma.general %s7, 32768, %s158, %s144, [#allocation10], [#allocation11], %s156, 0
    %v180 = vld [vmem:[%s3] sm:$0xff]
    %v181 = vld [vmem:[%s0] sm:$0xff]
    %v182 = vld [vmem:[%s0 + $0x8] sm:$0xff]
    %v183 = vld [vmem:[%s1] sm:$0xff]
    %v184 = vld [vmem:[%s1 + $0x8] sm:$0xff]
    %v186 = vrot.slane %v180, 5
    %vm187 = vcmask 23552
    %v189 = vsel %vm187, %v183, 0
    %v192 = vsel %vm187, %v184, 0
    %vm194 = vcmask 1042432
    %v195 = vsel %vm194, %v186, 0
    %197 = vmatprep.subr.mxu0 0.0
    %198 = vmatpush1.msra.mxu0 %v195
    %199 = vmatprep.subr.mxu0 0.0
    %200 = vmatpush1.msra.mxu0 0.0
    %201 = vmatprep.subr.mxu0 0.0
    %202 = vmatpush1.msra.mxu0 0.0
    %203 = vmatprep.subr.mxu0 0.0
    %204 = vmatpush1.msra.mxu0 0.0
    %205 = vmatprep.subr.mxu0 0.0
    %206 = vmatpush1.msra.mxu0 0.0
    %207 = vmatprep.subr.mxu0 0.0
    %208 = vmatpush1.msra.mxu0 0.0
    %209 = vmatprep.subr.mxu0 0.0
    %210 = vmatpush1.msra.mxu0 0.0
    %211 = vmatprep.subr.mxu0 0.0
    %212 = vmatpush1.msra.mxu0 0.0
    %213 = vmatprep.subr.mxu0 0.0
    %214 = vmatpush1.msra.mxu0 0.0
    %215 = vmatprep.subr.mxu0 0.0
    %216 = vmatpush1.msra.mxu0 0.0
    %217 = vmatprep.subr.mxu0 0.0
    %218 = vmatpush1.msra.mxu0 0.0
    %219 = vmatprep.subr.mxu0 0.0
    %220 = vmatpush1.msra.mxu0 0.0
    %221 = vmatprep.subr.mxu0 0.0
    %222 = vmatpush1.msra.mxu0 0.0
    %223 = vmatprep.subr.mxu0 0.0
    %224 = vmatpush1.msra.mxu0 0.0
    %225 = vmatprep.subr.mxu0 0.0
    %226 = vmatpush1.msra.mxu0 0.0
    %227 = vmatprep.subr.mxu0 0.0
    %228 = vmatpush1.msra.mxu0 0.0
    %229 = vmatprep.subr.mxu0 0.0
    %230 = vmatpush1.msra.mxu0 0.0
    %231 = vmatprep.subr.mxu0 0.0
    %232 = vmatpush1.msra.mxu0 0.0
    %233 = vmatprep.subr.mxu0 0.0
    %234 = vmatpush1.msra.mxu0 0.0
    %235 = vmatprep.subr.mxu0 0.0
    %236 = vmatpush1.msra.mxu0 0.0
    %237 = vmatprep.subr.mxu0 0.0
    %238 = vmatpush1.msra.mxu0 0.0
    %239 = vmatprep.subr.mxu0 0.0
    %240 = vmatpush1.msra.mxu0 0.0
    %241 = vmatprep.subr.mxu0 0.0
    %242 = vmatpush1.msra.mxu0 0.0
    %243 = vmatprep.subr.mxu0 0.0
    %244 = vmatpush1.msra.mxu0 0.0
    %245 = vmatprep.subr.mxu0 0.0
    %246 = vmatpush1.msra.mxu0 0.0
    %247 = vmatprep.subr.mxu0 0.0
    %248 = vmatpush1.msra.mxu0 0.0
    %249 = vmatprep.subr.mxu0 0.0
    %250 = vmatpush1.msra.mxu0 0.0
    %251 = vmatprep.subr.mxu0 0.0
    %252 = vmatpush1.msra.mxu0 0.0
    %253 = vmatprep.subr.mxu0 0.0
    %254 = vmatpush1.msra.mxu0 0.0
    %255 = vmatprep.subr.mxu0 0.0
    %256 = vmatpush1.msra.mxu0 0.0
    %257 = vmatprep.subr.mxu0 0.0
    %258 = vmatpush1.msra.mxu0 0.0
    %259 = vmatprep.subr.mxu0 0.0
    %260 = vmatpush1.msra.mxu0 0.0
    %261 = vmatprep.mubr.f32.mxu0 0.0
    %262 = vmatmul.mubr.f32.gmra.mrb[0].mxu0 %v189
    %v263 = vpop.f32.mrb[0].mxu0
    %v264 = vadd.f32 0.0, %v263
    %v265 = vpop.f32.mrb[0].mxu0
    %266 = vmatprep.mubr.f32.mxu0 0.0
    %267 = vmatmul.mubr.f32.gmra.mrb[0].mxu0 %v192
    %v268 = vpop.f32.mrb[0].mxu0
    %v269 = vadd.f32 0.0, %v268
    %v270 = vpop.f32.mrb[0].mxu0
    %271 = vdwg.mxu0
    %vm272 = vcmask 39936
    %v274 = vsel %vm272, %v181, 0
    %v277 = vsel %vm272, %v182, 0
    %vm279 = vcmask 1044480
    %v280 = vsel %vm279, %v180, 0
    %282 = vmatprep.subr.mxu0 0.0
    %283 = vmatpush1.msra.mxu0 %v280
    %284 = vmatprep.subr.mxu0 0.0
    %285 = vmatpush1.msra.mxu0 0.0
    %286 = vmatprep.subr.mxu0 0.0
    %287 = vmatpush1.msra.mxu0 0.0
    %288 = vmatprep.subr.mxu0 0.0
    %289 = vmatpush1.msra.mxu0 0.0
    %290 = vmatprep.subr.mxu0 0.0
    %291 = vmatpush1.msra.mxu0 0.0
    %292 = vmatprep.subr.mxu0 0.0
    %293 = vmatpush1.msra.mxu0 0.0
    %294 = vmatprep.subr.mxu0 0.0
    %295 = vmatpush1.msra.mxu0 0.0
    %296 = vmatprep.subr.mxu0 0.0
    %297 = vmatpush1.msra.mxu0 0.0
    %298 = vmatprep.subr.mxu0 0.0
    %299 = vmatpush1.msra.mxu0 0.0
    %300 = vmatprep.subr.mxu0 0.0
    %301 = vmatpush1.msra.mxu0 0.0
    %302 = vmatprep.subr.mxu0 0.0
    %303 = vmatpush1.msra.mxu0 0.0
    %304 = vmatprep.subr.mxu0 0.0
    %305 = vmatpush1.msra.mxu0 0.0
    %306 = vmatprep.subr.mxu0 0.0
    %307 = vmatpush1.msra.mxu0 0.0
    %308 = vmatprep.subr.mxu0 0.0
    %309 = vmatpush1.msra.mxu0 0.0
    %310 = vmatprep.subr.mxu0 0.0
    %311 = vmatpush1.msra.mxu0 0.0
    %312 = vmatprep.subr.mxu0 0.0
    %313 = vmatpush1.msra.mxu0 0.0
    %314 = vmatprep.subr.mxu0 0.0
    %315 = vmatpush1.msra.mxu0 0.0
    %316 = vmatprep.subr.mxu0 0.0
    %317 = vmatpush1.msra.mxu0 0.0
    %318 = vmatprep.subr.mxu0 0.0
    %319 = vmatpush1.msra.mxu0 0.0
    %320 = vmatprep.subr.mxu0 0.0
    %321 = vmatpush1.msra.mxu0 0.0
    %322 = vmatprep.subr.mxu0 0.0
    %323 = vmatpush1.msra.mxu0 0.0
    %324 = vmatprep.subr.mxu0 0.0
    %325 = vmatpush1.msra.mxu0 0.0
    %326 = vmatprep.subr.mxu0 0.0
    %327 = vmatpush1.msra.mxu0 0.0
    %328 = vmatprep.subr.mxu0 0.0
    %329 = vmatpush1.msra.mxu0 0.0
    %330 = vmatprep.subr.mxu0 0.0
    %331 = vmatpush1.msra.mxu0 0.0
    %332 = vmatprep.subr.mxu0 0.0
    %333 = vmatpush1.msra.mxu0 0.0
    %334 = vmatprep.subr.mxu0 0.0
    %335 = vmatpush1.msra.mxu0 0.0
    %336 = vmatprep.subr.mxu0 0.0
    %337 = vmatpush1.msra.mxu0 0.0
    %338 = vmatprep.subr.mxu0 0.0
    %339 = vmatpush1.msra.mxu0 0.0
    %340 = vmatprep.subr.mxu0 0.0
    %341 = vmatpush1.msra.mxu0 0.0
    %342 = vmatprep.subr.mxu0 0.0
    %343 = vmatpush1.msra.mxu0 0.0
    %344 = vmatprep.subr.mxu0 0.0
    %345 = vmatpush1.msra.mxu0 0.0
    %346 = vmatprep.mubr.f32.mxu0 0.0
    %347 = vmatmul.mubr.f32.gmra.mrb[0].mxu0 %v274
    %v348 = vpop.f32.mrb[0].mxu0
    %v349 = vadd.f32 %v264, %v348
    %v350 = vpop.f32.mrb[0].mxu0
    %351 = vmatprep.mubr.f32.mxu0 0.0
    %352 = vmatmul.mubr.f32.gmra.mrb[0].mxu0 %v277
    %v353 = vpop.f32.mrb[0].mxu0
    %v354 = vadd.f32 %v269, %v353
    %v355 = vpop.f32.mrb[0].mxu0
    %356 = vdwg.mxu0
    %v357 = vld [vmem:[%s3 + $0x8] sm:$0x1]
    %v358 = vlaneseq
    %v359 = vshrl.u32 %v358, 7
    %v360 = vsub.s32 0, %v359
    %v361 = vrot.slane %v357, %v360
    %v362 = vadd.f32 %v349, %v361
    %v363 = vadd.f32 %v354, %v361
    %v364 = vmul.f32 %v362, %v362
    %v365 = vmul.f32 %v363, %v363
    %v366 = vmul.f32 %v362, %v364
    %v367 = vmul.f32 %v363, %v365
    %v368 = vmul.f32 %v366, 0.044715
    %v369 = vmul.f32 %v367, 0.044715
    %v370 = vadd.f32 %v362, %v368
    %v371 = vadd.f32 %v363, %v369
    %v372 = vmul.f32 %v370, 0.7978846
    %v373 = vmul.f32 %v371, 0.7978846
    %v374 = vtanh.pop %v372
    %v375 = vtanh.pop %v373
    %v376 = vadd.f32 %v374, 1.0
    %v377 = vadd.f32 %v375, 1.0
    %v378 = vmul.f32 %v376, 0.5
    %v379 = vmul.f32 %v377, 0.5
    %v380 = vmul.f32 %v362, %v378
    %v381 = vmul.f32 %v363, %v379
    %v382 = vlaneseq
    %v383 = vshrl.u32 %v382, 7
    %v384 = vld [vmem:[%s2] sm:$0x1]
    %v385 = vlaneseq
    %v386 = vshrl.u32 %v385, 7
    %v387 = vsub.s32 0, %v386
    %v388 = vrot.slane %v384, %v387
    %vm389 = vcmp.eq.s32.totalorder %v388, %v383
    %v390 = vsel %vm389, 1, 0
    %v391 = vcvt.s32.f32 %v390
    %vm392 = vcmask 123904
    %v393 = vsel %vm392, %v391, 0.0
    %394 = vadd.xlane.f32.xlu0 %v393
    %v395 = vpop.xlane.xlu0 %394
    %v396 = vmax.f32 %v395, 1.0
    %v397 = vrcp.pop %v396
    %v398 = vmul.f32 %v391, %v397
    %vm399 = vcmask 130048
    %v401 = vsel %vm399, %v398, 0
    %403 = vmatprep.subr.mxu0 0.0
    %404 = vmatpush1.msra.mxu0 %v380
    %405 = vmatprep.subr.mxu0 0.0
    %406 = vmatpush1.msra.mxu0 %v381
    %407 = vmatprep.subr.mxu0 0.0
    %408 = vmatpush1.msra.mxu0 0.0
    %409 = vmatprep.subr.mxu0 0.0
    %410 = vmatpush1.msra.mxu0 0.0
    %411 = vmatprep.subr.mxu0 0.0
    %412 = vmatpush1.msra.mxu0 0.0
    %413 = vmatprep.subr.mxu0 0.0
    %414 = vmatpush1.msra.mxu0 0.0
    %415 = vmatprep.subr.mxu0 0.0
    %416 = vmatpush1.msra.mxu0 0.0
    %417 = vmatprep.subr.mxu0 0.0
    %418 = vmatpush1.msra.mxu0 0.0
    %419 = vmatprep.subr.mxu0 0.0
    %420 = vmatpush1.msra.mxu0 0.0
    %421 = vmatprep.subr.mxu0 0.0
    %422 = vmatpush1.msra.mxu0 0.0
    %423 = vmatprep.subr.mxu0 0.0
    %424 = vmatpush1.msra.mxu0 0.0
    %425 = vmatprep.subr.mxu0 0.0
    %426 = vmatpush1.msra.mxu0 0.0
    %427 = vmatprep.subr.mxu0 0.0
    %428 = vmatpush1.msra.mxu0 0.0
    %429 = vmatprep.subr.mxu0 0.0
    %430 = vmatpush1.msra.mxu0 0.0
    %431 = vmatprep.subr.mxu0 0.0
    %432 = vmatpush1.msra.mxu0 0.0
    %433 = vmatprep.subr.mxu0 0.0
    %434 = vmatpush1.msra.mxu0 0.0
    %435 = vmatprep.subr.mxu0 0.0
    %436 = vmatpush1.msra.mxu0 0.0
    %437 = vmatprep.subr.mxu0 0.0
    %438 = vmatpush1.msra.mxu0 0.0
    %439 = vmatprep.subr.mxu0 0.0
    %440 = vmatpush1.msra.mxu0 0.0
    %441 = vmatprep.subr.mxu0 0.0
    %442 = vmatpush1.msra.mxu0 0.0
    %443 = vmatprep.subr.mxu0 0.0
    %444 = vmatpush1.msra.mxu0 0.0
    %445 = vmatprep.subr.mxu0 0.0
    %446 = vmatpush1.msra.mxu0 0.0
    %447 = vmatprep.subr.mxu0 0.0
    %448 = vmatpush1.msra.mxu0 0.0
    %449 = vmatprep.subr.mxu0 0.0
    %450 = vmatpush1.msra.mxu0 0.0
    %451 = vmatprep.subr.mxu0 0.0
    %452 = vmatpush1.msra.mxu0 0.0
    %453 = vmatprep.subr.mxu0 0.0
    %454 = vmatpush1.msra.mxu0 0.0
    %455 = vmatprep.subr.mxu0 0.0
    %456 = vmatpush1.msra.mxu0 0.0
    %457 = vmatprep.subr.mxu0 0.0
    %458 = vmatpush1.msra.mxu0 0.0
    %459 = vmatprep.subr.mxu0 0.0
    %460 = vmatpush1.msra.mxu0 0.0
    %461 = vmatprep.subr.mxu0 0.0
    %462 = vmatpush1.msra.mxu0 0.0
    %463 = vmatprep.subr.mxu0 0.0
    %464 = vmatpush1.msra.mxu0 0.0
    %465 = vmatprep.subr.mxu0 0.0
    %466 = vmatpush1.msra.mxu0 0.0
    %467 = vmatprep.mubr.f32.mxu0 0.0
    %468 = vmatmul.mubr.f32.gmra.mrb[0].mxu0 %v401
    %v469 = vpop.f32.mrb[0].mxu0
    %v470 = vadd.f32 0.0, %v469
    %v471 = vpop.f32.mrb[0].mxu0
    %472 = vdwg.mxu0
    %v473 = vld [vmem:[%s3 + $0x10] sm:$0xff]
    %v474 = vld [vmem:[%s3 + $0x18] sm:$0xff]
    %v475 = vld [vmem:[%s3 + $0x20] sm:$0x1]
    %v476 = vlaneseq
    %v477 = vshrl.u32 %v476, 7
    %v478 = vsub.s32 0, %v477
    %v479 = vrot.slane %v475, %v478
    %v481 = vsel %vm399, %v470, 0
    %483 = vmatprep.subr.mxu0 0.0
    %484 = vmatpush1.msra.mxu0 %v473
    %485 = vmatprep.subr.mxu0 0.0
    %486 = vmatpush1.msra.mxu0 %v474
    %487 = vmatprep.subr.mxu0 0.0
    %488 = vmatpush1.msra.mxu0 0.0
    %489 = vmatprep.subr.mxu0 0.0
    %490 = vmatpush1.msra.mxu0 0.0
    %491 = vmatprep.subr.mxu0 0.0
    %492 = vmatpush1.msra.mxu0 0.0
    %493 = vmatprep.subr.mxu0 0.0
    %494 = vmatpush1.msra.mxu0 0.0
    %495 = vmatprep.subr.mxu0 0.0
    %496 = vmatpush1.msra.mxu0 0.0
    %497 = vmatprep.subr.mxu0 0.0
    %498 = vmatpush1.msra.mxu0 0.0
    %499 = vmatprep.subr.mxu0 0.0
    %500 = vmatpush1.msra.mxu0 0.0
    %501 = vmatprep.subr.mxu0 0.0
    %502 = vmatpush1.msra.mxu0 0.0
    %503 = vmatprep.subr.mxu0 0.0
    %504 = vmatpush1.msra.mxu0 0.0
    %505 = vmatprep.subr.mxu0 0.0
    %506 = vmatpush1.msra.mxu0 0.0
    %507 = vmatprep.subr.mxu0 0.0
    %508 = vmatpush1.msra.mxu0 0.0
    %509 = vmatprep.subr.mxu0 0.0
    %510 = vmatpush1.msra.mxu0 0.0
    %511 = vmatprep.subr.mxu0 0.0
    %512 = vmatpush1.msra.mxu0 0.0
    %513 = vmatprep.subr.mxu0 0.0
    %514 = vmatpush1.msra.mxu0 0.0
    %515 = vmatprep.subr.mxu0 0.0
    %516 = vmatpush1.msra.mxu0 0.0
    %517 = vmatprep.subr.mxu0 0.0
    %518 = vmatpush1.msra.mxu0 0.0
    %519 = vmatprep.subr.mxu0 0.0
    %520 = vmatpush1.msra.mxu0 0.0
    %521 = vmatprep.subr.mxu0 0.0
    %522 = vmatpush1.msra.mxu0 0.0
    %523 = vmatprep.subr.mxu0 0.0
    %524 = vmatpush1.msra.mxu0 0.0
    %525 = vmatprep.subr.mxu0 0.0
    %526 = vmatpush1.msra.mxu0 0.0
    %527 = vmatprep.subr.mxu0 0.0
    %528 = vmatpush1.msra.mxu0 0.0
    %529 = vmatprep.subr.mxu0 0.0
    %530 = vmatpush1.msra.mxu0 0.0
    %531 = vmatprep.subr.mxu0 0.0
    %532 = vmatpush1.msra.mxu0 0.0
    %533 = vmatprep.subr.mxu0 0.0
    %534 = vmatpush1.msra.mxu0 0.0
    %535 = vmatprep.subr.mxu0 0.0
    %536 = vmatpush1.msra.mxu0 0.0
    %537 = vmatprep.subr.mxu0 0.0
    %538 = vmatpush1.msra.mxu0 0.0
    %539 = vmatprep.subr.mxu0 0.0
    %540 = vmatpush1.msra.mxu0 0.0
    %541 = vmatprep.subr.mxu0 0.0
    %542 = vmatpush1.msra.mxu0 0.0
    %543 = vmatprep.subr.mxu0 0.0
    %544 = vmatpush1.msra.mxu0 0.0
    %545 = vmatprep.subr.mxu0 0.0
    %546 = vmatpush1.msra.mxu0 0.0
    %547 = vmatprep.mubr.f32.mxu0 0.0
    %548 = vmatmul.mubr.f32.gmra.mrb[0].mxu0 %v481
    %v549 = vpop.f32.mrb[0].mxu0
    %v550 = vadd.f32 %v479, %v549
    %v551 = vpop.f32.mrb[0].mxu0
    %552 = vdwg.mxu0
    %v553 = vmul.f32 %v550, %v550
    %v554 = vmul.f32 %v550, %v553
    %v555 = vmul.f32 %v554, 0.044715
    %v556 = vadd.f32 %v550, %v555
    %v557 = vmul.f32 %v556, 0.7978846
    %v558 = vtanh.pop %v557
    %v559 = vadd.f32 %v558, 1.0
    %v560 = vmul.f32 %v559, 0.5
    %v561 = vmul.f32 %v550, %v560
    %v562 = vld [vmem:[%s3 + $0x28] sm:$0xff]
    %v563 = vld [vmem:[%s3 + $0x30] sm:$0xff]
    %v564 = vld [vmem:[%s3 + $0x38] sm:$0xff]
    %v565 = vld [vmem:[%s3 + $0x40] sm:$0xff]
    %v566 = vld [vmem:[%s3 + $0x48] sm:$0x1]
    %v567 = vlaneseq
    %v568 = vshrl.u32 %v567, 7
    %v569 = vsub.s32 0, %v568
    %v570 = vrot.slane %v566, %v569
    %vm571 = vcmask 261120
    %v573 = vsel %vm571, %v561, 0
    %575 = vmatprep.subr.mxu0 0.0
    %576 = vmatpush1.msra.mxu0 %v562
    %577 = vmatprep.subr.mxu0 0.0
    %578 = vmatpush1.msra.mxu0 %v563
    %579 = vmatprep.subr.mxu0 0.0
    %580 = vmatpush1.msra.mxu0 %v564
    %581 = vmatprep.subr.mxu0 0.0
    %582 = vmatpush1.msra.mxu0 %v565
    %583 = vmatprep.subr.mxu0 0.0
    %584 = vmatpush1.msra.mxu0 0.0
    %585 = vmatprep.subr.mxu0 0.0
    %586 = vmatpush1.msra.mxu0 0.0
    %587 = vmatprep.subr.mxu0 0.0
    %588 = vmatpush1.msra.mxu0 0.0
    %589 = vmatprep.subr.mxu0 0.0
    %590 = vmatpush1.msra.mxu0 0.0
    %591 = vmatprep.subr.mxu0 0.0
    %592 = vmatpush1.msra.mxu0 0.0
    %593 = vmatprep.subr.mxu0 0.0
    %594 = vmatpush1.msra.mxu0 0.0
    %595 = vmatprep.subr.mxu0 0.0
    %596 = vmatpush1.msra.mxu0 0.0
    %597 = vmatprep.subr.mxu0 0.0
    %598 = vmatpush1.msra.mxu0 0.0
    %599 = vmatprep.subr.mxu0 0.0
    %600 = vmatpush1.msra.mxu0 0.0
    %601 = vmatprep.subr.mxu0 0.0
    %602 = vmatpush1.msra.mxu0 0.0
    %603 = vmatprep.subr.mxu0 0.0
    %604 = vmatpush1.msra.mxu0 0.0
    %605 = vmatprep.subr.mxu0 0.0
    %606 = vmatpush1.msra.mxu0 0.0
    %607 = vmatprep.subr.mxu0 0.0
    %608 = vmatpush1.msra.mxu0 0.0
    %609 = vmatprep.subr.mxu0 0.0
    %610 = vmatpush1.msra.mxu0 0.0
    %611 = vmatprep.subr.mxu0 0.0
    %612 = vmatpush1.msra.mxu0 0.0
    %613 = vmatprep.subr.mxu0 0.0
    %614 = vmatpush1.msra.mxu0 0.0
    %615 = vmatprep.subr.mxu0 0.0
    %616 = vmatpush1.msra.mxu0 0.0
    %617 = vmatprep.subr.mxu0 0.0
    %618 = vmatpush1.msra.mxu0 0.0
    %619 = vmatprep.subr.mxu0 0.0
    %620 = vmatpush1.msra.mxu0 0.0
    %621 = vmatprep.subr.mxu0 0.0
    %622 = vmatpush1.msra.mxu0 0.0
    %623 = vmatprep.subr.mxu0 0.0
    %624 = vmatpush1.msra.mxu0 0.0
    %625 = vmatprep.subr.mxu0 0.0
    %626 = vmatpush1.msra.mxu0 0.0
    %627 = vmatprep.subr.mxu0 0.0
    %628 = vmatpush1.msra.mxu0 0.0
    %629 = vmatprep.subr.mxu0 0.0
    %630 = vmatpush1.msra.mxu0 0.0
    %631 = vmatprep.subr.mxu0 0.0
    %632 = vmatpush1.msra.mxu0 0.0
    %633 = vmatprep.subr.mxu0 0.0
    %634 = vmatpush1.msra.mxu0 0.0
    %635 = vmatprep.subr.mxu0 0.0
    %636 = vmatpush1.msra.mxu0 0.0
    %637 = vmatprep.subr.mxu0 0.0
    %638 = vmatpush1.msra.mxu0 0.0
    %639 = vmatprep.mubr.f32.mxu0 0.0
    %640 = vmatmul.mubr.f32.gmra.mrb[0].mxu0 %v573
    %v641 = vpop.f32.mrb[0].mxu0
    %v642 = vadd.f32 %v570, %v641
    %v643 = vpop.f32.mrb[0].mxu0
    %644 = vdwg.mxu0
    %v645 = vmul.f32 %v642, %v642
    %v646 = vmul.f32 %v642, %v645
    %v647 = vmul.f32 %v646, 0.044715
    %v648 = vadd.f32 %v642, %v647
    %v649 = vmul.f32 %v648, 0.7978846
    %v650 = vtanh.pop %v649
    %v651 = vadd.f32 %v650, 1.0
    %v652 = vmul.f32 %v651, 0.5
    %v653 = vmul.f32 %v642, %v652
    %v654 = vld [vmem:[%s3 + $0x50] sm:$0xff]
    %v655 = vld [vmem:[%s3 + $0x58] sm:$0xff]
    %v656 = vld [vmem:[%s3 + $0x60] sm:$0xff]
    %v657 = vld [vmem:[%s3 + $0x68] sm:$0xff]
    %v658 = vld [vmem:[%s3 + $0x70] sm:$0x1]
    %v659 = vlaneseq
    %v660 = vshrl.u32 %v659, 7
    %v661 = vsub.s32 0, %v660
    %v662 = vrot.slane %v658, %v661
    %v664 = vsel %vm571, %v653, 0
    %666 = vmatprep.subr.mxu0 0.0
    %667 = vmatpush1.msra.mxu0 %v654
    %668 = vmatprep.subr.mxu0 0.0
    %669 = vmatpush1.msra.mxu0 %v655
    %670 = vmatprep.subr.mxu0 0.0
    %671 = vmatpush1.msra.mxu0 %v656
    %672 = vmatprep.subr.mxu0 0.0
    %673 = vmatpush1.msra.mxu0 %v657
    %674 = vmatprep.subr.mxu0 0.0
    %675 = vmatpush1.msra.mxu0 0.0
    %676 = vmatprep.subr.mxu0 0.0
    %677 = vmatpush1.msra.mxu0 0.0
    %678 = vmatprep.subr.mxu0 0.0
    %679 = vmatpush1.msra.mxu0 0.0
    %680 = vmatprep.subr.mxu0 0.0
    %681 = vmatpush1.msra.mxu0 0.0
    %682 = vmatprep.subr.mxu0 0.0
    %683 = vmatpush1.msra.mxu0 0.0
    %684 = vmatprep.subr.mxu0 0.0
    %685 = vmatpush1.msra.mxu0 0.0
    %686 = vmatprep.subr.mxu0 0.0
    %687 = vmatpush1.msra.mxu0 0.0
    %688 = vmatprep.subr.mxu0 0.0
    %689 = vmatpush1.msra.mxu0 0.0
    %690 = vmatprep.subr.mxu0 0.0
    %691 = vmatpush1.msra.mxu0 0.0
    %692 = vmatprep.subr.mxu0 0.0
    %693 = vmatpush1.msra.mxu0 0.0
    %694 = vmatprep.subr.mxu0 0.0
    %695 = vmatpush1.msra.mxu0 0.0
    %696 = vmatprep.subr.mxu0 0.0
    %697 = vmatpush1.msra.mxu0 0.0
    %698 = vmatprep.subr.mxu0 0.0
    %699 = vmatpush1.msra.mxu0 0.0
    %700 = vmatprep.subr.mxu0 0.0
    %701 = vmatpush1.msra.mxu0 0.0
    %702 = vmatprep.subr.mxu0 0.0
    %703 = vmatpush1.msra.mxu0 0.0
    %704 = vmatprep.subr.mxu0 0.0
    %705 = vmatpush1.msra.mxu0 0.0
    %706 = vmatprep.subr.mxu0 0.0
    %707 = vmatpush1.msra.mxu0 0.0
    %708 = vmatprep.subr.mxu0 0.0
    %709 = vmatpush1.msra.mxu0 0.0
    %710 = vmatprep.subr.mxu0 0.0
    %711 = vmatpush1.msra.mxu0 0.0
    %712 = vmatprep.subr.mxu0 0.0
    %713 = vmatpush1.msra.mxu0 0.0
    %714 = vmatprep.subr.mxu0 0.0
    %715 = vmatpush1.msra.mxu0 0.0
    %716 = vmatprep.subr.mxu0 0.0
    %717 = vmatpush1.msra.mxu0 0.0
    %718 = vmatprep.subr.mxu0 0.0
    %719 = vmatpush1.msra.mxu0 0.0
    %720 = vmatprep.subr.mxu0 0.0
    %721 = vmatpush1.msra.mxu0 0.0
    %722 = vmatprep.subr.mxu0 0.0
    %723 = vmatpush1.msra.mxu0 0.0
    %724 = vmatprep.subr.mxu0 0.0
    %725 = vmatpush1.msra.mxu0 0.0
    %726 = vmatprep.subr.mxu0 0.0
    %727 = vmatpush1.msra.mxu0 0.0
    %728 = vmatprep.subr.mxu0 0.0
    %729 = vmatpush1.msra.mxu0 0.0
    %730 = vmatprep.mubr.f32.mxu0 0.0
    %731 = vmatmul.mubr.f32.gmra.mrb[0].mxu0 %v664
    %v732 = vpop.f32.mrb[0].mxu0
    %v733 = vadd.f32 %v662, %v732
    %v734 = vpop.f32.mrb[0].mxu0
    %735 = vdwg.mxu0
    %v736 = vpack.c.bf16 %v733, %v733
    %v737 = vld [vmem:[%s8] sm:$0xff]
    %v738 = vld [vmem:[%s8 + $0x8] sm:$0xff]
    %v739 = vld [vmem:[%s8 + $0x10] sm:$0xff]
    %v740 = vld [vmem:[%s8 + $0x18] sm:$0xff]
    %v741 = vld [vmem:[%s4] ss:$8 sm:$0x3]
    %v743 = vlaneseq
    %v744 = vshrl.u32 %v743, 7
    %v745 = vsub.s32 0, %v744
    %v746 = vrot.slane %v741, %v745
    %v747 = vlaneseq
    %v748 = vshrl.u32 %v747, 7
    %v749 = vsub.s32 1, %v748
    %v750 = vrot.slane %v741, %v749
    %v757 = vunpack.c.l.b16 %v737
    %v758 = vunpack.c.h.b16 %v737
    %v759 = vunpack.c.l.b16 %v738
    %v760 = vunpack.c.h.b16 %v738
    %v761 = vunpack.c.l.b16 %v739
    %v762 = vunpack.c.h.b16 %v739
    %v763 = vunpack.c.l.b16 %v740
    %v764 = vunpack.c.h.b16 %v740
    %v765 = vpack.c.b16 %v759, %v757
    %v766 = vpack.c.b16 %v760, %v758
    %v767 = vpack.c.b16 %v763, %v761
    %v768 = vpack.c.b16 %v764, %v762
    %v774 = vsel %vm571, %v736, 0
    %776 = vmatprep.subr.bf16.mxu0 %v766
    %777 = vmatpush1.bf16.msra.mxu0 %v765
    %778 = vmatprep.subr.bf16.mxu0 %v768
    %779 = vmatpush1.bf16.msra.mxu0 %v767
    %780 = vmatprep.subr.bf16.mxu0 0
    %781 = vmatpush1.bf16.msra.mxu0 0
    %782 = vmatprep.subr.bf16.mxu0 0
    %783 = vmatpush1.bf16.msra.mxu0 0
    %784 = vmatprep.subr.bf16.mxu0 0
    %785 = vmatpush1.bf16.msra.mxu0 0
    %786 = vmatprep.subr.bf16.mxu0 0
    %787 = vmatpush1.bf16.msra.mxu0 0
    %788 = vmatprep.subr.bf16.mxu0 0
    %789 = vmatpush1.bf16.msra.mxu0 0
    %790 = vmatprep.subr.bf16.mxu0 0
    %791 = vmatpush1.bf16.msra.mxu0 0
    %792 = vmatprep.subr.bf16.mxu0 0
    %793 = vmatpush1.bf16.msra.mxu0 0
    %794 = vmatprep.subr.bf16.mxu0 0
    %795 = vmatpush1.bf16.msra.mxu0 0
    %796 = vmatprep.subr.bf16.mxu0 0
    %797 = vmatpush1.bf16.msra.mxu0 0
    %798 = vmatprep.subr.bf16.mxu0 0
    %799 = vmatpush1.bf16.msra.mxu0 0
    %800 = vmatprep.subr.bf16.mxu0 0
    %801 = vmatpush1.bf16.msra.mxu0 0
    %802 = vmatprep.subr.bf16.mxu0 0
    %803 = vmatpush1.bf16.msra.mxu0 0
    %804 = vmatprep.subr.bf16.mxu0 0
    %805 = vmatpush1.bf16.msra.mxu0 0
    %806 = vmatprep.subr.bf16.mxu0 0
    %807 = vmatpush1.bf16.msra.mxu0 0
    %808 = vmatprep.mubr.bf16.mxu0 0
    %809 = vmatmul.mubr.bf16.gmra.mrb[0].mxu0 %v774
    %v810 = vpop.f32.mrb[0].mxu0
    %v811 = vadd.f32 %v746, %v810
    %v812 = vpop.f32.mrb[0].mxu0
    %v813 = vadd.f32 %v750, %v812
    %v814 = vpop.f32.mrb[0].mxu0
    %v815 = vpop.f32.mrb[0].mxu0
    %816 = vdwg.mxu0
    %s817 = scalar_lea.vmem %s4, 1
    %v818 = vld [vmem:[%s817] ss:$8 sm:$0x3]
    %s819 = scalar_lea.vmem %s4, 2
    %v820 = vld [vmem:[%s819] ss:$8 sm:$0x3]
    %vm821 = vcmask 1041408
    %v822 = vsel %vm821, %v811, 0.0
    %v823 = vsel %vm821, %v813, 0.0
    %v824 = vadd.f32 %v822, %v823
    %825 = vadd.xlane.f32.xlu0 %v824
    %v826 = vpop.xlane.xlu0 %825
    %v827 = vrcp.pop 256.0
    %v828 = vmul.f32 %v826, %v827
    %v829 = vsub.f32 %v811, %v828
    %v830 = vsub.f32 %v813, %v828
    %v831 = vmul.f32 %v829, %v829
    %v832 = vmul.f32 %v830, %v830
    %v833 = vsel %vm821, %v831, 0.0
    %v834 = vsel %vm821, %v832, 0.0
    %v835 = vadd.f32 %v833, %v834
    %836 = vadd.xlane.f32.xlu0 %v835
    %v837 = vpop.xlane.xlu0 %836
    %v838 = vmul.f32 %v837, %v827
    %v839 = vadd.f32 %v838, 1e-05
    %v840 = vrsqrt.pop %v839
    %v841 = vmul.f32 %v829, %v840
    %v842 = vmul.f32 %v830, %v840
    %v844 = vlaneseq
    %v845 = vshrl.u32 %v844, 7
    %v846 = vsub.s32 0, %v845
    %v847 = vrot.slane %v818, %v846
    %v848 = vlaneseq
    %v849 = vshrl.u32 %v848, 7
    %v850 = vsub.s32 1, %v849
    %v851 = vrot.slane %v818, %v850
    %v854 = vmul.f32 %v841, %v847
    %v855 = vmul.f32 %v842, %v851
    %v857 = vlaneseq
    %v858 = vshrl.u32 %v857, 7
    %v859 = vsub.s32 0, %v858
    %v860 = vrot.slane %v820, %v859
    %v861 = vlaneseq
    %v862 = vshrl.u32 %v861, 7
    %v863 = vsub.s32 1, %v862
    %v864 = vrot.slane %v820, %v863
    %v867 = vadd.f32 %v854, %v860
    %v868 = vadd.f32 %v855, %v864
    %v869 = vmul.f32 %v867, %v867
    %v870 = vmul.f32 %v868, %v868
    %v871 = vmul.f32 %v867, %v869
    %v872 = vmul.f32 %v868, %v870
    %v873 = vmul.f32 %v871, 0.044715
    %v874 = vmul.f32 %v872, 0.044715
    %v875 = vadd.f32 %v867, %v873
    %v876 = vadd.f32 %v868, %v874
    %v877 = vmul.f32 %v875, 0.7978846
    %v878 = vmul.f32 %v876, 0.7978846
    %v879 = vtanh.pop %v877
    %v880 = vtanh.pop %v878
    %v881 = vadd.f32 %v879, 1.0
    %v882 = vadd.f32 %v880, 1.0
    %v883 = vmul.f32 %v881, 0.5
    %v884 = vmul.f32 %v882, 0.5
    %v885 = vmul.f32 %v867, %v883
    %v886 = vmul.f32 %v868, %v884
    %v887 = vpack.c.bf16 %v885, %v885
    %v888 = vpack.c.bf16 %v886, %v886
    %v889 = vld [vmem:[#allocation5] sm:$0xff]
    %v890 = vld [vmem:[#allocation5 + $0x8] sm:$0xff]
    %v891 = vld [vmem:[#allocation5 + $0x10] sm:$0xff]
    %v892 = vld [vmem:[#allocation5 + $0x18] sm:$0xff]
    %v893 = vld [vmem:[#allocation5 + $0x20] sm:$0xff]
    %v894 = vld [vmem:[#allocation5 + $0x28] sm:$0xff]
    %v895 = vld [vmem:[#allocation5 + $0x30] sm:$0xff]
    %v896 = vld [vmem:[#allocation5 + $0x38] sm:$0xff]
    %v897 = vld [vmem:[#allocation5 + $0x40] sm:$0xff]
    %v898 = vld [vmem:[#allocation5 + $0x48] sm:$0xff]
    %v899 = vld [vmem:[#allocation5 + $0x50] sm:$0xff]
    %v900 = vld [vmem:[#allocation5 + $0x58] sm:$0xff]
    %v901 = vld [vmem:[#allocation5 + $0x60] sm:$0xff]
    %v902 = vld [vmem:[#allocation5 + $0x68] sm:$0xff]
    %v903 = vld [vmem:[#allocation5 + $0x70] sm:$0xff]
    %v904 = vld [vmem:[#allocation5 + $0x78] sm:$0xff]
    %v905 = vld [vmem:[#allocation5 + $0x80] sm:$0xff]
    %v906 = vld [vmem:[#allocation5 + $0x88] sm:$0xff]
    %v907 = vld [vmem:[#allocation5 + $0x90] sm:$0xff]
    %v908 = vld [vmem:[#allocation5 + $0x98] sm:$0xff]
    %v909 = vld [vmem:[#allocation5 + $0xa0] sm:$0xff]
    %v910 = vld [vmem:[#allocation5 + $0xa8] sm:$0xff]
    %v911 = vld [vmem:[#allocation5 + $0xb0] sm:$0xff]
    %v912 = vld [vmem:[#allocation5 + $0xb8] sm:$0xff]
    %v913 = vld [vmem:[#allocation5 + $0xc0] sm:$0xff]
    %v914 = vld [vmem:[#allocation5 + $0xc8] sm:$0xff]
    %v915 = vld [vmem:[#allocation5 + $0xd0] sm:$0xff]
    %v916 = vld [vmem:[#allocation5 + $0xd8] sm:$0xff]
    %v917 = vld [vmem:[#allocation5 + $0xe0] sm:$0xff]
    %v918 = vld [vmem:[#allocation5 + $0xe8] sm:$0xff]
    %v919 = vld [vmem:[#allocation5 + $0xf0] sm:$0xff]
    %v920 = vld [vmem:[#allocation5 + $0xf8] sm:$0xff]
    %s921 = scalar_lea.vmem %s4, 3
    %v922 = vld [vmem:[%s921] ss:$8 sm:$0x3]
    %v924 = vlaneseq
    %v925 = vshrl.u32 %v924, 7
    %v926 = vsub.s32 0, %v925
    %v927 = vrot.slane %v922, %v926
    %v928 = vlaneseq
    %v929 = vshrl.u32 %v928, 7
    %v930 = vsub.s32 1, %v929
    %v931 = vrot.slane %v922, %v930
    %v966 = vunpack.c.l.b16 %v889
    %v967 = vunpack.c.h.b16 %v889
    %v968 = vunpack.c.l.b16 %v890
    %v969 = vunpack.c.h.b16 %v890
    %v970 = vunpack.c.l.b16 %v891
    %v971 = vunpack.c.h.b16 %v891
    %v972 = vunpack.c.l.b16 %v892
    %v973 = vunpack.c.h.b16 %v892
    %v974 = vunpack.c.l.b16 %v893
    %v975 = vunpack.c.h.b16 %v893
    %v976 = vunpack.c.l.b16 %v894
    %v977 = vunpack.c.h.b16 %v894
    %v978 = vunpack.c.l.b16 %v895
    %v979 = vunpack.c.h.b16 %v895
    %v980 = vunpack.c.l.b16 %v896
    %v981 = vunpack.c.h.b16 %v896
    %v982 = vunpack.c.l.b16 %v897
    %v983 = vunpack.c.h.b16 %v897
    %v984 = vunpack.c.l.b16 %v898
    %v985 = vunpack.c.h.b16 %v898
    %v986 = vunpack.c.l.b16 %v899
    %v987 = vunpack.c.h.b16 %v899
    %v988 = vunpack.c.l.b16 %v900
    %v989 = vunpack.c.h.b16 %v900
    %v990 = vunpack.c.l.b16 %v901
    %v991 = vunpack.c.h.b16 %v901
    %v992 = vunpack.c.l.b16 %v902
    %v993 = vunpack.c.h.b16 %v902
    %v994 = vunpack.c.l.b16 %v903
    %v995 = vunpack.c.h.b16 %v903
    %v996 = vunpack.c.l.b16 %v904
    %v997 = vunpack.c.h.b16 %v904
    %v998 = vunpack.c.l.b16 %v905
    %v999 = vunpack.c.h.b16 %v905
    %v1000 = vunpack.c.l.b16 %v906
    %v1001 = vunpack.c.h.b16 %v906
    %v1002 = vunpack.c.l.b16 %v907
    %v1003 = vunpack.c.h.b16 %v907
    %v1004 = vunpack.c.l.b16 %v908
    %v1005 = vunpack.c.h.b16 %v908
    %v1006 = vunpack.c.l.b16 %v909
    %v1007 = vunpack.c.h.b16 %v909
    %v1008 = vunpack.c.l.b16 %v910
    %v1009 = vunpack.c.h.b16 %v910
    %v1010 = vunpack.c.l.b16 %v911
    %v1011 = vunpack.c.h.b16 %v911
    %v1012 = vunpack.c.l.b16 %v912
    %v1013 = vunpack.c.h.b16 %v912
    %v1014 = vunpack.c.l.b16 %v913
    %v1015 = vunpack.c.h.b16 %v913
    %v1016 = vunpack.c.l.b16 %v914
    %v1017 = vunpack.c.h.b16 %v914
    %v1018 = vunpack.c.l.b16 %v915
    %v1019 = vunpack.c.h.b16 %v915
    %v1020 = vunpack.c.l.b16 %v916
    %v1021 = vunpack.c.h.b16 %v916
    %v1022 = vunpack.c.l.b16 %v917
    %v1023 = vunpack.c.h.b16 %v917
    %v1024 = vunpack.c.l.b16 %v918
    %v1025 = vunpack.c.h.b16 %v918
    %v1026 = vunpack.c.l.b16 %v919
    %v1027 = vunpack.c.h.b16 %v919
    %v1028 = vunpack.c.l.b16 %v920
    %v1029 = vunpack.c.h.b16 %v920
    %v1030 = vpack.c.b16 %v968, %v966
    %v1031 = vpack.c.b16 %v969, %v967
    %v1032 = vpack.c.b16 %v972, %v970
    %v1033 = vpack.c.b16 %v973, %v971
    %v1034 = vpack.c.b16 %v976, %v974
    %v1035 = vpack.c.b16 %v977, %v975
    %v1036 = vpack.c.b16 %v980, %v978
    %v1037 = vpack.c.b16 %v981, %v979
    %v1038 = vpack.c.b16 %v984, %v982
    %v1039 = vpack.c.b16 %v985, %v983
    %v1040 = vpack.c.b16 %v988, %v986
    %v1041 = vpack.c.b16 %v989, %v987
    %v1042 = vpack.c.b16 %v992, %v990
    %v1043 = vpack.c.b16 %v993, %v991
    %v1044 = vpack.c.b16 %v996, %v994
    %v1045 = vpack.c.b16 %v997, %v995
    %v1046 = vpack.c.b16 %v1000, %v998
    %v1047 = vpack.c.b16 %v1001, %v999
    %v1048 = vpack.c.b16 %v1004, %v1002
    %v1049 = vpack.c.b16 %v1005, %v1003
    %v1050 = vpack.c.b16 %v1008, %v1006
    %v1051 = vpack.c.b16 %v1009, %v1007
    %v1052 = vpack.c.b16 %v1012, %v1010
    %v1053 = vpack.c.b16 %v1013, %v1011
    %v1054 = vpack.c.b16 %v1016, %v1014
    %v1055 = vpack.c.b16 %v1017, %v1015
    %v1056 = vpack.c.b16 %v1020, %v1018
    %v1057 = vpack.c.b16 %v1021, %v1019
    %v1058 = vpack.c.b16 %v1024, %v1022
    %v1059 = vpack.c.b16 %v1025, %v1023
    %v1060 = vpack.c.b16 %v1028, %v1026
    %v1061 = vpack.c.b16 %v1029, %v1027
    %1094 = vmatprep.subr.bf16.mxu0 %v1031
    %1095 = vmatpush1.bf16.msra.mxu0 %v1030
    %1096 = vmatprep.subr.bf16.mxu0 %v1033
    %1097 = vmatpush1.bf16.msra.mxu0 %v1032
    %1098 = vmatprep.subr.bf16.mxu0 %v1035
    %1099 = vmatpush1.bf16.msra.mxu0 %v1034
    %1100 = vmatprep.subr.bf16.mxu0 %v1037
    %1101 = vmatpush1.bf16.msra.mxu0 %v1036
    %1102 = vmatprep.subr.bf16.mxu0 %v1039
    %1103 = vmatpush1.bf16.msra.mxu0 %v1038
    %1104 = vmatprep.subr.bf16.mxu0 %v1041
    %1105 = vmatpush1.bf16.msra.mxu0 %v1040
    %1106 = vmatprep.subr.bf16.mxu0 %v1043
    %1107 = vmatpush1.bf16.msra.mxu0 %v1042
    %1108 = vmatprep.subr.bf16.mxu0 %v1045
    %1109 = vmatpush1.bf16.msra.mxu0 %v1044
    %1110 = vmatprep.subr.bf16.mxu0 %v1047
    %1111 = vmatpush1.bf16.msra.mxu0 %v1046
    %1112 = vmatprep.subr.bf16.mxu0 %v1049
    %1113 = vmatpush1.bf16.msra.mxu0 %v1048
    %1114 = vmatprep.subr.bf16.mxu0 %v1051
    %1115 = vmatpush1.bf16.msra.mxu0 %v1050
    %1116 = vmatprep.subr.bf16.mxu0 %v1053
    %1117 = vmatpush1.bf16.msra.mxu0 %v1052
    %1118 = vmatprep.subr.bf16.mxu0 %v1055
    %1119 = vmatpush1.bf16.msra.mxu0 %v1054
    %1120 = vmatprep.subr.bf16.mxu0 %v1057
    %1121 = vmatpush1.bf16.msra.mxu0 %v1056
    %1122 = vmatprep.subr.bf16.mxu0 %v1059
    %1123 = vmatpush1.bf16.msra.mxu0 %v1058
    %1124 = vmatprep.subr.bf16.mxu0 %v1061
    %1125 = vmatpush1.bf16.msra.mxu0 %v1060
    %1126 = vmatprep.mubr.bf16.mxu0 %v888
    %1127 = vmatmul.mubr.bf16.gmra.mrb[0].mxu0 %v887
    %v1128 = vpop.f32.mrb[0].mxu0
    %v1129 = vadd.f32 %v927, %v1128
    %v1130 = vpop.f32.mrb[0].mxu0
    %v1131 = vadd.f32 %v931, %v1130
    %v1132 = vpop.f32.mrb[0].mxu0
    %v1133 = vpop.f32.mrb[0].mxu0
    %1134 = vdwg.mxu0
    %s1135 = scalar_lea.vmem %s4, 4
    %v1136 = vld [vmem:[%s1135] ss:$8 sm:$0x3]
    %s1137 = scalar_lea.vmem %s4, 5
    %v1138 = vld [vmem:[%s1137] ss:$8 sm:$0x3]
    %v1139 = vsel %vm821, %v1129, 0.0
    %v1140 = vsel %vm821, %v1131, 0.0
    %v1141 = vadd.f32 %v1139, %v1140
    %1142 = vadd.xlane.f32.xlu0 %v1141
    %v1143 = vpop.xlane.xlu0 %1142
    %v1144 = vmul.f32 %v1143, %v827
    %v1145 = vsub.f32 %v1129, %v1144
    %v1146 = vsub.f32 %v1131, %v1144
    %v1147 = vmul.f32 %v1145, %v1145
    %v1148 = vmul.f32 %v1146, %v1146
    %v1149 = vsel %vm821, %v1147, 0.0
    %v1150 = vsel %vm821, %v1148, 0.0
    %v1151 = vadd.f32 %v1149, %v1150
    %1152 = vadd.xlane.f32.xlu0 %v1151
    %v1153 = vpop.xlane.xlu0 %1152
    %v1154 = vmul.f32 %v1153, %v827
    %v1155 = vadd.f32 %v1154, 1e-05
    %v1156 = vrsqrt.pop %v1155
    %v1157 = vmul.f32 %v1145, %v1156
    %v1158 = vmul.f32 %v1146, %v1156
    %v1160 = vlaneseq
    %v1161 = vshrl.u32 %v1160, 7
    %v1162 = vsub.s32 0, %v1161
    %v1163 = vrot.slane %v1136, %v1162
    %v1164 = vlaneseq
    %v1165 = vshrl.u32 %v1164, 7
    %v1166 = vsub.s32 1, %v1165
    %v1167 = vrot.slane %v1136, %v1166
    %v1170 = vmul.f32 %v1157, %v1163
    %v1171 = vmul.f32 %v1158, %v1167
    %v1173 = vlaneseq
    %v1174 = vshrl.u32 %v1173, 7
    %v1175 = vsub.s32 0, %v1174
    %v1176 = vrot.slane %v1138, %v1175
    %v1177 = vlaneseq
    %v1178 = vshrl.u32 %v1177, 7
    %v1179 = vsub.s32 1, %v1178
    %v1180 = vrot.slane %v1138, %v1179
    %v1183 = vadd.f32 %v1170, %v1176
    %v1184 = vadd.f32 %v1171, %v1180
    %v1185 = vmul.f32 %v1183, %v1183
    %v1186 = vmul.f32 %v1184, %v1184
    %v1187 = vmul.f32 %v1183, %v1185
    %v1188 = vmul.f32 %v1184, %v1186
    %v1189 = vmul.f32 %v1187, 0.044715
    %v1190 = vmul.f32 %v1188, 0.044715
    %v1191 = vadd.f32 %v1183, %v1189
    %v1192 = vadd.f32 %v1184, %v1190
    %v1193 = vmul.f32 %v1191, 0.7978846
    %v1194 = vmul.f32 %v1192, 0.7978846
    %v1195 = vtanh.pop %v1193
    %v1196 = vtanh.pop %v1194
    %v1197 = vadd.f32 %v1195, 1.0
    %v1198 = vadd.f32 %v1196, 1.0
    %v1199 = vmul.f32 %v1197, 0.5
    %v1200 = vmul.f32 %v1198, 0.5
    %v1201 = vmul.f32 %v1183, %v1199
    %v1202 = vmul.f32 %v1184, %v1200
    %s1203 = scalar_lea.vmem %s4, 6
    %v1204 = vld [vmem:[%s1203] ss:$8 sm:$0x3]
    %v1206 = vlaneseq
    %v1207 = vshrl.u32 %v1206, 7
    %v1208 = vsub.s32 0, %v1207
    %v1209 = vrot.slane %v1204, %v1208
    %v1210 = vlaneseq
    %v1211 = vshrl.u32 %v1210, 7
    %v1212 = vsub.s32 1, %v1211
    %v1213 = vrot.slane %v1204, %v1212
    %v1216 = vmul.f32 %v1201, %v1209
    %v1217 = vmul.f32 %v1202, %v1213
    %v1218 = vsel %vm821, %v1216, 0.0
    %v1219 = vsel %vm821, %v1217, 0.0
    %v1220 = vadd.f32 %v1218, %v1219
    %1221 = vadd.xlane.f32.xlu0 %v1220
    %v1222 = vpop.xlane.xlu0 %1221
    %v1223 = vld [vmem:[%s4 + $0x7] ss:$0 sm:$0xff]
    %v1224 = vadd.f32 %v1222, %v1223
    %vm1225 = vcmask 1024
    %1226 = vst.msk [vmem:[%s12] sm:$0x3] %vm1225, %v1224
    %s1227 = smul.u32 4, 4
    %s1228 = smul.u32 %s1227, 2
    %s1229 = sshll.u32 %s1228, 4
    %1230 = dma.done [#allocation4], %s1229
    %v1231 = vld [vmem:[#allocation2] sm:$0xff]
    %v1232 = vld [vmem:[#allocation2 + $0x8] sm:$0xff]
    %v1233 = vld [vmem:[#allocation2 + $0x10] sm:$0xff]
    %v1234 = vld [vmem:[#allocation2 + $0x18] sm:$0xff]
    %s1235 = scalar_lea.vmem %s4, 16
    %v1236 = vld [vmem:[%s1235] ss:$8 sm:$0x3]
    %v1238 = vlaneseq
    %v1239 = vshrl.u32 %v1238, 7
    %v1240 = vsub.s32 0, %v1239
    %v1241 = vrot.slane %v1236, %v1240
    %v1242 = vlaneseq
    %v1243 = vshrl.u32 %v1242, 7
    %v1244 = vsub.s32 1, %v1243
    %v1245 = vrot.slane %v1236, %v1244
    %1248 = vmatprep.subr.bf16.mxu0 %v1232
    %1249 = vmatpush1.bf16.msra.mxu0 %v1231
    %1250 = vmatprep.subr.bf16.mxu0 %v1234
    %1251 = vmatpush1.bf16.msra.mxu0 %v1233
    %1252 = vmatprep.subr.bf16.mxu0 0
    %1253 = vmatpush1.bf16.msra.mxu0 0
    %1254 = vmatprep.subr.bf16.mxu0 0
    %1255 = vmatpush1.bf16.msra.mxu0 0
    %1256 = vmatprep.subr.bf16.mxu0 0
    %1257 = vmatpush1.bf16.msra.mxu0 0
    %1258 = vmatprep.subr.bf16.mxu0 0
    %1259 = vmatpush1.bf16.msra.mxu0 0
    %1260 = vmatprep.subr.bf16.mxu0 0
    %1261 = vmatpush1.bf16.msra.mxu0 0
    %1262 = vmatprep.subr.bf16.mxu0 0
    %1263 = vmatpush1.bf16.msra.mxu0 0
    %1264 = vmatprep.subr.bf16.mxu0 0
    %1265 = vmatpush1.bf16.msra.mxu0 0
    %1266 = vmatprep.subr.bf16.mxu0 0
    %1267 = vmatpush1.bf16.msra.mxu0 0
    %1268 = vmatprep.subr.bf16.mxu0 0
    %1269 = vmatpush1.bf16.msra.mxu0 0
    %1270 = vmatprep.subr.bf16.mxu0 0
    %1271 = vmatpush1.bf16.msra.mxu0 0
    %1272 = vmatprep.subr.bf16.mxu0 0
    %1273 = vmatpush1.bf16.msra.mxu0 0
    %1274 = vmatprep.subr.bf16.mxu0 0
    %1275 = vmatpush1.bf16.msra.mxu0 0
    %1276 = vmatprep.subr.bf16.mxu0 0
    %1277 = vmatpush1.bf16.msra.mxu0 0
    %1278 = vmatprep.subr.bf16.mxu0 0
    %1279 = vmatpush1.bf16.msra.mxu0 0
    %1280 = vmatprep.mubr.bf16.mxu0 0
    %1281 = vmatmul.mubr.bf16.gmra.mrb[0].mxu0 %v774
    %v1282 = vpop.f32.mrb[0].mxu0
    %v1283 = vadd.f32 %v1241, %v1282
    %v1284 = vpop.f32.mrb[0].mxu0
    %v1285 = vadd.f32 %v1245, %v1284
    %v1286 = vpop.f32.mrb[0].mxu0
    %v1287 = vpop.f32.mrb[0].mxu0
    %1288 = vdwg.mxu0
    %v1289 = vmax.f32 %v1283, 0.0
    %v1290 = vmax.f32 %v1285, 0.0
    %s1291 = smul.u32 4, 32
    %s1292 = smul.u32 %s1291, 16
    %s1293 = sshll.u32 %s1292, 4
    %1294 = dma.done %s144, %s1293
    %v1295 = vpack.c.bf16 %v1289, %v1289
    %v1296 = vpack.c.bf16 %v1290, %v1290
    %v1297 = vld [vmem:[#allocation3] sm:$0xff]
    %v1298 = vld [vmem:[#allocation3 + $0x8] sm:$0xff]
    %v1299 = vld [vmem:[#allocation3 + $0x10] sm:$0xff]
    %v1300 = vld [vmem:[#allocation3 + $0x18] sm:$0xff]
    %v1301 = vld [vmem:[#allocation3 + $0x20] sm:$0xff]
    %v1302 = vld [vmem:[#allocation3 + $0x28] sm:$0xff]
    %v1303 = vld [vmem:[#allocation3 + $0x30] sm:$0xff]
    %v1304 = vld [vmem:[#allocation3 + $0x38] sm:$0xff]
    %v1305 = vld [vmem:[#allocation3 + $0x40] sm:$0xff]
    %v1306 = vld [vmem:[#allocation3 + $0x48] sm:$0xff]
    %v1307 = vld [vmem:[#allocation3 + $0x50] sm:$0xff]
    %v1308 = vld [vmem:[#allocation3 + $0x58] sm:$0xff]
    %v1309 = vld [vmem:[#allocation3 + $0x60] sm:$0xff]
    %v1310 = vld [vmem:[#allocation3 + $0x68] sm:$0xff]
    %v1311 = vld [vmem:[#allocation3 + $0x70] sm:$0xff]
    %v1312 = vld [vmem:[#allocation3 + $0x78] sm:$0xff]
    %v1313 = vld [vmem:[#allocation3 + $0x80] sm:$0xff]
    %v1314 = vld [vmem:[#allocation3 + $0x88] sm:$0xff]
    %v1315 = vld [vmem:[#allocation3 + $0x90] sm:$0xff]
    %v1316 = vld [vmem:[#allocation3 + $0x98] sm:$0xff]
    %v1317 = vld [vmem:[#allocation3 + $0xa0] sm:$0xff]
    %v1318 = vld [vmem:[#allocation3 + $0xa8] sm:$0xff]
    %v1319 = vld [vmem:[#allocation3 + $0xb0] sm:$0xff]
    %v1320 = vld [vmem:[#allocation3 + $0xb8] sm:$0xff]
    %v1321 = vld [vmem:[#allocation3 + $0xc0] sm:$0xff]
    %v1322 = vld [vmem:[#allocation3 + $0xc8] sm:$0xff]
    %v1323 = vld [vmem:[#allocation3 + $0xd0] sm:$0xff]
    %v1324 = vld [vmem:[#allocation3 + $0xd8] sm:$0xff]
    %v1325 = vld [vmem:[#allocation3 + $0xe0] sm:$0xff]
    %v1326 = vld [vmem:[#allocation3 + $0xe8] sm:$0xff]
    %v1327 = vld [vmem:[#allocation3 + $0xf0] sm:$0xff]
    %v1328 = vld [vmem:[#allocation3 + $0xf8] sm:$0xff]
    %v1329 = vld [vmem:[#allocation3 + $0x100] sm:$0xff]
    %v1330 = vld [vmem:[#allocation3 + $0x108] sm:$0xff]
    %v1331 = vld [vmem:[#allocation3 + $0x110] sm:$0xff]
    %v1332 = vld [vmem:[#allocation3 + $0x118] sm:$0xff]
    %v1333 = vld [vmem:[#allocation3 + $0x120] sm:$0xff]
    %v1334 = vld [vmem:[#allocation3 + $0x128] sm:$0xff]
    %v1335 = vld [vmem:[#allocation3 + $0x130] sm:$0xff]
    %v1336 = vld [vmem:[#allocation3 + $0x138] sm:$0xff]
    %v1337 = vld [vmem:[#allocation3 + $0x140] sm:$0xff]
    %v1338 = vld [vmem:[#allocation3 + $0x148] sm:$0xff]
    %v1339 = vld [vmem:[#allocation3 + $0x150] sm:$0xff]
    %v1340 = vld [vmem:[#allocation3 + $0x158] sm:$0xff]
    %v1341 = vld [vmem:[#allocation3 + $0x160] sm:$0xff]
    %v1342 = vld [vmem:[#allocation3 + $0x168] sm:$0xff]
    %v1343 = vld [vmem:[#allocation3 + $0x170] sm:$0xff]
    %v1344 = vld [vmem:[#allocation3 + $0x178] sm:$0xff]
    %v1345 = vld [vmem:[#allocation3 + $0x180] sm:$0xff]
    %v1346 = vld [vmem:[#allocation3 + $0x188] sm:$0xff]
    %v1347 = vld [vmem:[#allocation3 + $0x190] sm:$0xff]
    %v1348 = vld [vmem:[#allocation3 + $0x198] sm:$0xff]
    %v1349 = vld [vmem:[#allocation3 + $0x1a0] sm:$0xff]
    %v1350 = vld [vmem:[#allocation3 + $0x1a8] sm:$0xff]
    %v1351 = vld [vmem:[#allocation3 + $0x1b0] sm:$0xff]
    %v1352 = vld [vmem:[#allocation3 + $0x1b8] sm:$0xff]
    %v1353 = vld [vmem:[#allocation3 + $0x1c0] sm:$0xff]
    %v1354 = vld [vmem:[#allocation3 + $0x1c8] sm:$0xff]
    %v1355 = vld [vmem:[#allocation3 + $0x1d0] sm:$0xff]
    %v1356 = vld [vmem:[#allocation3 + $0x1d8] sm:$0xff]
    %v1357 = vld [vmem:[#allocation3 + $0x1e0] sm:$0xff]
    %v1358 = vld [vmem:[#allocation3 + $0x1e8] sm:$0xff]
    %v1359 = vld [vmem:[#allocation3 + $0x1f0] sm:$0xff]
    %v1360 = vld [vmem:[#allocation3 + $0x1f8] sm:$0xff]
    %v1361 = vld [vmem:[#allocation3 + $0x200] sm:$0xff]
    %v1362 = vld [vmem:[#allocation3 + $0x208] sm:$0xff]
    %v1363 = vld [vmem:[#allocation3 + $0x210] sm:$0xff]
    %v1364 = vld [vmem:[#allocation3 + $0x218] sm:$0xff]
    %v1365 = vld [vmem:[#allocation3 + $0x220] sm:$0xff]
    %v1366 = vld [vmem:[#allocation3 + $0x228] sm:$0xff]
    %v1367 = vld [vmem:[#allocation3 + $0x230] sm:$0xff]
    %v1368 = vld [vmem:[#allocation3 + $0x238] sm:$0xff]
    %v1369 = vld [vmem:[#allocation3 + $0x240] sm:$0xff]
    %v1370 = vld [vmem:[#allocation3 + $0x248] sm:$0xff]
    %v1371 = vld [vmem:[#allocation3 + $0x250] sm:$0xff]
    %v1372 = vld [vmem:[#allocation3 + $0x258] sm:$0xff]
    %v1373 = vld [vmem:[#allocation3 + $0x260] sm:$0xff]
    %v1374 = vld [vmem:[#allocation3 + $0x268] sm:$0xff]
    %v1375 = vld [vmem:[#allocation3 + $0x270] sm:$0xff]
    %v1376 = vld [vmem:[#allocation3 + $0x278] sm:$0xff]
    %v1377 = vld [vmem:[#allocation3 + $0x280] sm:$0xff]
    %v1378 = vld [vmem:[#allocation3 + $0x288] sm:$0xff]
    %v1379 = vld [vmem:[#allocation3 + $0x290] sm:$0xff]
    %v1380 = vld [vmem:[#allocation3 + $0x298] sm:$0xff]
    %v1381 = vld [vmem:[#allocation3 + $0x2a0] sm:$0xff]
    %v1382 = vld [vmem:[#allocation3 + $0x2a8] sm:$0xff]
    %v1383 = vld [vmem:[#allocation3 + $0x2b0] sm:$0xff]
    %v1384 = vld [vmem:[#allocation3 + $0x2b8] sm:$0xff]
    %v1385 = vld [vmem:[#allocation3 + $0x2c0] sm:$0xff]
    %v1386 = vld [vmem:[#allocation3 + $0x2c8] sm:$0xff]
    %v1387 = vld [vmem:[#allocation3 + $0x2d0] sm:$0xff]
    %v1388 = vld [vmem:[#allocation3 + $0x2d8] sm:$0xff]
    %v1389 = vld [vmem:[#allocation3 + $0x2e0] sm:$0xff]
    %v1390 = vld [vmem:[#allocation3 + $0x2e8] sm:$0xff]
    %v1391 = vld [vmem:[#allocation3 + $0x2f0] sm:$0xff]
    %v1392 = vld [vmem:[#allocation3 + $0x2f8] sm:$0xff]
    %v1393 = vld [vmem:[#allocation3 + $0x300] sm:$0xff]
    %v1394 = vld [vmem:[#allocation3 + $0x308] sm:$0xff]
    %v1395 = vld [vmem:[#allocation3 + $0x310] sm:$0xff]
    %v1396 = vld [vmem:[#allocation3 + $0x318] sm:$0xff]
    %v1397 = vld [vmem:[#allocation3 + $0x320] sm:$0xff]
    %v1398 = vld [vmem:[#allocation3 + $0x328] sm:$0xff]
    %v1399 = vld [vmem:[#allocation3 + $0x330] sm:$0xff]
    %v1400 = vld [vmem:[#allocation3 + $0x338] sm:$0xff]
    %v1401 = vld [vmem:[#allocation3 + $0x340] sm:$0xff]
    %v1402 = vld [vmem:[#allocation3 + $0x348] sm:$0xff]
    %v1403 = vld [vmem:[#allocation3 + $0x350] sm:$0xff]
    %v1404 = vld [vmem:[#allocation3 + $0x358] sm:$0xff]
    %v1405 = vld [vmem:[#allocation3 + $0x360] sm:$0xff]
    %v1406 = vld [vmem:[#allocation3 + $0x368] sm:$0xff]
    %v1407 = vld [vmem:[#allocation3 + $0x370] sm:$0xff]
    %v1408 = vld [vmem:[#allocation3 + $0x378] sm:$0xff]
    %v1409 = vld [vmem:[#allocation3 + $0x380] sm:$0xff]
    %v1410 = vld [vmem:[#allocation3 + $0x388] sm:$0xff]
    %v1411 = vld [vmem:[#allocation3 + $0x390] sm:$0xff]
    %v1412 = vld [vmem:[#allocation3 + $0x398] sm:$0xff]
    %v1413 = vld [vmem:[#allocation3 + $0x3a0] sm:$0xff]
    %v1414 = vld [vmem:[#allocation3 + $0x3a8] sm:$0xff]
    %v1415 = vld [vmem:[#allocation3 + $0x3b0] sm:$0xff]
    %v1416 = vld [vmem:[#allocation3 + $0x3b8] sm:$0xff]
    %v1417 = vld [vmem:[#allocation3 + $0x3c0] sm:$0xff]
    %v1418 = vld [vmem:[#allocation3 + $0x3c8] sm:$0xff]
    %v1419 = vld [vmem:[#allocation3 + $0x3d0] sm:$0xff]
    %v1420 = vld [vmem:[#allocation3 + $0x3d8] sm:$0xff]
    %v1421 = vld [vmem:[#allocation3 + $0x3e0] sm:$0xff]
    %v1422 = vld [vmem:[#allocation3 + $0x3e8] sm:$0xff]
    %v1423 = vld [vmem:[#allocation3 + $0x3f0] sm:$0xff]
    %v1424 = vld [vmem:[#allocation3 + $0x3f8] sm:$0xff]
    %v1425 = vld [vmem:[#allocation3 + $0x400] sm:$0xff]
    %v1426 = vld [vmem:[#allocation3 + $0x408] sm:$0xff]
    %v1427 = vld [vmem:[#allocation3 + $0x410] sm:$0xff]
    %v1428 = vld [vmem:[#allocation3 + $0x418] sm:$0xff]
    %v1429 = vld [vmem:[#allocation3 + $0x420] sm:$0xff]
    %v1430 = vld [vmem:[#allocation3 + $0x428] sm:$0xff]
    %v1431 = vld [vmem:[#allocation3 + $0x430] sm:$0xff]
    %v1432 = vld [vmem:[#allocation3 + $0x438] sm:$0xff]
    %v1433 = vld [vmem:[#allocation3 + $0x440] sm:$0xff]
    %v1434 = vld [vmem:[#allocation3 + $0x448] sm:$0xff]
    %v1435 = vld [vmem:[#allocation3 + $0x450] sm:$0xff]
    %v1436 = vld [vmem:[#allocation3 + $0x458] sm:$0xff]
    %v1437 = vld [vmem:[#allocation3 + $0x460] sm:$0xff]
    %v1438 = vld [vmem:[#allocation3 + $0x468] sm:$0xff]
    %v1439 = vld [vmem:[#allocation3 + $0x470] sm:$0xff]
    %v1440 = vld [vmem:[#allocation3 + $0x478] sm:$0xff]
    %v1441 = vld [vmem:[#allocation3 + $0x480] sm:$0xff]
    %v1442 = vld [vmem:[#allocation3 + $0x488] sm:$0xff]
    %v1443 = vld [vmem:[#allocation3 + $0x490] sm:$0xff]
    %v1444 = vld [vmem:[#allocation3 + $0x498] sm:$0xff]
    %v1445 = vld [vmem:[#allocation3 + $0x4a0] sm:$0xff]
    %v1446 = vld [vmem:[#allocation3 + $0x4a8] sm:$0xff]
    %v1447 = vld [vmem:[#allocation3 + $0x4b0] sm:$0xff]
    %v1448 = vld [vmem:[#allocation3 + $0x4b8] sm:$0xff]
    %v1449 = vld [vmem:[#allocation3 + $0x4c0] sm:$0xff]
    %v1450 = vld [vmem:[#allocation3 + $0x4c8] sm:$0xff]
    %v1451 = vld [vmem:[#allocation3 + $0x4d0] sm:$0xff]
    %v1452 = vld [vmem:[#allocation3 + $0x4d8] sm:$0xff]
    %v1453 = vld [vmem:[#allocation3 + $0x4e0] sm:$0xff]
    %v1454 = vld [vmem:[#allocation3 + $0x4e8] sm:$0xff]
    %v1455 = vld [vmem:[#allocation3 + $0x4f0] sm:$0xff]
    %v1456 = vld [vmem:[#allocation3 + $0x4f8] sm:$0xff]
    %v1457 = vld [vmem:[#allocation3 + $0x500] sm:$0xff]
    %v1458 = vld [vmem:[#allocation3 + $0x508] sm:$0xff]
    %v1459 = vld [vmem:[#allocation3 + $0x510] sm:$0xff]
    %v1460 = vld [vmem:[#allocation3 + $0x518] sm:$0xff]
    %v1461 = vld [vmem:[#allocation3 + $0x520] sm:$0xff]
    %v1462 = vld [vmem:[#allocation3 + $0x528] sm:$0xff]
    %v1463 = vld [vmem:[#allocation3 + $0x530] sm:$0xff]
    %v1464 = vld [vmem:[#allocation3 + $0x538] sm:$0xff]
    %v1465 = vld [vmem:[#allocation3 + $0x540] sm:$0xff]
    %v1466 = vld [vmem:[#allocation3 + $0x548] sm:$0xff]
    %v1467 = vld [vmem:[#allocation3 + $0x550] sm:$0xff]
    %v1468 = vld [vmem:[#allocation3 + $0x558] sm:$0xff]
    %v1469 = vld [vmem:[#allocation3 + $0x560] sm:$0xff]
    %v1470 = vld [vmem:[#allocation3 + $0x568] sm:$0xff]
    %v1471 = vld [vmem:[#allocation3 + $0x570] sm:$0xff]
    %v1472 = vld [vmem:[#allocation3 + $0x578] sm:$0xff]
    %v1473 = vld [vmem:[#allocation3 + $0x580] sm:$0xff]
    %v1474 = vld [vmem:[#allocation3 + $0x588] sm:$0xff]
    %v1475 = vld [vmem:[#allocation3 + $0x590] sm:$0xff]
    %v1476 = vld [vmem:[#allocation3 + $0x598] sm:$0xff]
    %v1477 = vld [vmem:[#allocation3 + $0x5a0] sm:$0xff]
    %v1478 = vld [vmem:[#allocation3 + $0x5a8] sm:$0xff]
    %v1479 = vld [vmem:[#allocation3 + $0x5b0] sm:$0xff]
    %v1480 = vld [vmem:[#allocation3 + $0x5b8] sm:$0xff]
    %v1481 = vld [vmem:[#allocation3 + $0x5c0] sm:$0xff]
    %v1482 = vld [vmem:[#allocation3 + $0x5c8] sm:$0xff]
    %v1483 = vld [vmem:[#allocation3 + $0x5d0] sm:$0xff]
    %v1484 = vld [vmem:[#allocation3 + $0x5d8] sm:$0xff]
    %v1485 = vld [vmem:[#allocation3 + $0x5e0] sm:$0xff]
    %v1486 = vld [vmem:[#allocation3 + $0x5e8] sm:$0xff]
    %v1487 = vld [vmem:[#allocation3 + $0x5f0] sm:$0xff]
    %v1488 = vld [vmem:[#allocation3 + $0x5f8] sm:$0xff]
    %v1489 = vld [vmem:[#allocation3 + $0x600] sm:$0xff]
    %v1490 = vld [vmem:[#allocation3 + $0x608] sm:$0xff]
    %v1491 = vld [vmem:[#allocation3 + $0x610] sm:$0xff]
    %v1492 = vld [vmem:[#allocation3 + $0x618] sm:$0xff]
    %v1493 = vld [vmem:[#allocation3 + $0x620] sm:$0xff]
    %v1494 = vld [vmem:[#allocation3 + $0x628] sm:$0xff]
    %v1495 = vld [vmem:[#allocation3 + $0x630] sm:$0xff]
    %v1496 = vld [vmem:[#allocation3 + $0x638] sm:$0xff]
    %v1497 = vld [vmem:[#allocation3 + $0x640] sm:$0xff]
    %v1498 = vld [vmem:[#allocation3 + $0x648] sm:$0xff]
    %v1499 = vld [vmem:[#allocation3 + $0x650] sm:$0xff]
    %v1500 = vld [vmem:[#allocation3 + $0x658] sm:$0xff]
    %v1501 = vld [vmem:[#allocation3 + $0x660] sm:$0xff]
    %v1502 = vld [vmem:[#allocation3 + $0x668] sm:$0xff]
    %v1503 = vld [vmem:[#allocation3 + $0x670] sm:$0xff]
    %v1504 = vld [vmem:[#allocation3 + $0x678] sm:$0xff]
    %v1505 = vld [vmem:[#allocation3 + $0x680] sm:$0xff]
    %v1506 = vld [vmem:[#allocation3 + $0x688] sm:$0xff]
    %v1507 = vld [vmem:[#allocation3 + $0x690] sm:$0xff]
    %v1508 = vld [vmem:[#allocation3 + $0x698] sm:$0xff]
    %v1509 = vld [vmem:[#allocation3 + $0x6a0] sm:$0xff]
    %v1510 = vld [vmem:[#allocation3 + $0x6a8] sm:$0xff]
    %v1511 = vld [vmem:[#allocation3 + $0x6b0] sm:$0xff]
    %v1512 = vld [vmem:[#allocation3 + $0x6b8] sm:$0xff]
    %v1513 = vld [vmem:[#allocation3 + $0x6c0] sm:$0xff]
    %v1514 = vld [vmem:[#allocation3 + $0x6c8] sm:$0xff]
    %v1515 = vld [vmem:[#allocation3 + $0x6d0] sm:$0xff]
    %v1516 = vld [vmem:[#allocation3 + $0x6d8] sm:$0xff]
    %v1517 = vld [vmem:[#allocation3 + $0x6e0] sm:$0xff]
    %v1518 = vld [vmem:[#allocation3 + $0x6e8] sm:$0xff]
    %v1519 = vld [vmem:[#allocation3 + $0x6f0] sm:$0xff]
    %v1520 = vld [vmem:[#allocation3 + $0x6f8] sm:$0xff]
    %v1521 = vld [vmem:[#allocation3 + $0x700] sm:$0xff]
    %v1522 = vld [vmem:[#allocation3 + $0x708] sm:$0xff]
    %v1523 = vld [vmem:[#allocation3 + $0x710] sm:$0xff]
    %v1524 = vld [vmem:[#allocation3 + $0x718] sm:$0xff]
    %v1525 = vld [vmem:[#allocation3 + $0x720] sm:$0xff]
    %v1526 = vld [vmem:[#allocation3 + $0x728] sm:$0xff]
    %v1527 = vld [vmem:[#allocation3 + $0x730] sm:$0xff]
    %v1528 = vld [vmem:[#allocation3 + $0x738] sm:$0xff]
    %v1529 = vld [vmem:[#allocation3 + $0x740] sm:$0xff]
    %v1530 = vld [vmem:[#allocation3 + $0x748] sm:$0xff]
    %v1531 = vld [vmem:[#allocation3 + $0x750] sm:$0xff]
    %v1532 = vld [vmem:[#allocation3 + $0x758] sm:$0xff]
    %v1533 = vld [vmem:[#allocation3 + $0x760] sm:$0xff]
    %v1534 = vld [vmem:[#allocation3 + $0x768] sm:$0xff]
    %v1535 = vld [vmem:[#allocation3 + $0x770] sm:$0xff]
    %v1536 = vld [vmem:[#allocation3 + $0x778] sm:$0xff]
    %v1537 = vld [vmem:[#allocation3 + $0x780] sm:$0xff]
    %v1538 = vld [vmem:[#allocation3 + $0x788] sm:$0xff]
    %v1539 = vld [vmem:[#allocation3 + $0x790] sm:$0xff]
    %v1540 = vld [vmem:[#allocation3 + $0x798] sm:$0xff]
    %v1541 = vld [vmem:[#allocation3 + $0x7a0] sm:$0xff]
    %v1542 = vld [vmem:[#allocation3 + $0x7a8] sm:$0xff]
    %v1543 = vld [vmem:[#allocation3 + $0x7b0] sm:$0xff]
    %v1544 = vld [vmem:[#allocation3 + $0x7b8] sm:$0xff]
    %v1545 = vld [vmem:[#allocation3 + $0x7c0] sm:$0xff]
    %v1546 = vld [vmem:[#allocation3 + $0x7c8] sm:$0xff]
    %v1547 = vld [vmem:[#allocation3 + $0x7d0] sm:$0xff]
    %v1548 = vld [vmem:[#allocation3 + $0x7d8] sm:$0xff]
    %v1549 = vld [vmem:[#allocation3 + $0x7e0] sm:$0xff]
    %v1550 = vld [vmem:[#allocation3 + $0x7e8] sm:$0xff]
    %v1551 = vld [vmem:[#allocation3 + $0x7f0] sm:$0xff]
    %v1552 = vld [vmem:[#allocation3 + $0x7f8] sm:$0xff]
    %v1553 = vld [vmem:[%s5] sm:$0xff]
    %v1554 = vld [vmem:[%s5 + $0x8] sm:$0xff]
    %v1557 = vlaneseq
    %v1558 = vshrl.u32 %v1557, 7
    %v1559 = vsub.s32 0, %v1558
    %v1560 = vrot.slane %v1553, %v1559
    %v1561 = vlaneseq
    %v1562 = vshrl.u32 %v1561, 7
    %v1563 = vsub.s32 1, %v1562
    %v1564 = vrot.slane %v1553, %v1563
    %v1565 = vlaneseq
    %v1566 = vshrl.u32 %v1565, 7
    %v1567 = vsub.s32 2, %v1566
    %v1568 = vrot.slane %v1553, %v1567
    %v1569 = vlaneseq
    %v1570 = vshrl.u32 %v1569, 7
    %v1571 = vsub.s32 3, %v1570
    %v1572 = vrot.slane %v1553, %v1571
    %v1573 = vlaneseq
    %v1574 = vshrl.u32 %v1573, 7
    %v1575 = vsub.s32 4, %v1574
    %v1576 = vrot.slane %v1553, %v1575
    %v1577 = vlaneseq
    %v1578 = vshrl.u32 %v1577, 7
    %v1579 = vsub.s32 5, %v1578
    %v1580 = vrot.slane %v1553, %v1579
    %v1581 = vlaneseq
    %v1582 = vshrl.u32 %v1581, 7
    %v1583 = vsub.s32 6, %v1582
    %v1584 = vrot.slane %v1553, %v1583
    %v1585 = vlaneseq
    %v1586 = vshrl.u32 %v1585, 7
    %v1587 = vsub.s32 7, %v1586
    %v1588 = vrot.slane %v1553, %v1587
    %v1589 = vlaneseq
    %v1590 = vshrl.u32 %v1589, 7
    %v1591 = vsub.s32 0, %v1590
    %v1592 = vrot.slane %v1554, %v1591
    %v1593 = vlaneseq
    %v1594 = vshrl.u32 %v1593, 7
    %v1595 = vsub.s32 1, %v1594
    %v1596 = vrot.slane %v1554, %v1595
    %v1597 = vlaneseq
    %v1598 = vshrl.u32 %v1597, 7
    %v1599 = vsub.s32 2, %v1598
    %v1600 = vrot.slane %v1554, %v1599
    %v1601 = vlaneseq
    %v1602 = vshrl.u32 %v1601, 7
    %v1603 = vsub.s32 3, %v1602
    %v1604 = vrot.slane %v1554, %v1603
    %v1605 = vlaneseq
    %v1606 = vshrl.u32 %v1605, 7
    %v1607 = vsub.s32 4, %v1606
    %v1608 = vrot.slane %v1554, %v1607
    %v1609 = vlaneseq
    %v1610 = vshrl.u32 %v1609, 7
    %v1611 = vsub.s32 5, %v1610
    %v1612 = vrot.slane %v1554, %v1611
    %v1613 = vlaneseq
    %v1614 = vshrl.u32 %v1613, 7
    %v1615 = vsub.s32 6, %v1614
    %v1616 = vrot.slane %v1554, %v1615
    %v1617 = vlaneseq
    %v1618 = vshrl.u32 %v1617, 7
    %v1619 = vsub.s32 7, %v1618
    %v1620 = vrot.slane %v1554, %v1619
    %1637 = vmatprep.subr.bf16.mxu0 %v1298
    %1638 = vmatpush1.bf16.msra.mxu0 %v1297
    %1639 = vmatprep.subr.bf16.mxu0 %v1314
    %1640 = vmatpush1.bf16.msra.mxu0 %v1313
    %1641 = vmatprep.subr.bf16.mxu0 %v1330
    %1642 = vmatpush1.bf16.msra.mxu0 %v1329
    %1643 = vmatprep.subr.bf16.mxu0 %v1346
    %1644 = vmatpush1.bf16.msra.mxu0 %v1345
    %1645 = vmatprep.subr.bf16.mxu0 %v1362
    %1646 = vmatpush1.bf16.msra.mxu0 %v1361
    %1647 = vmatprep.subr.bf16.mxu0 %v1378
    %1648 = vmatpush1.bf16.msra.mxu0 %v1377
    %1649 = vmatprep.subr.bf16.mxu0 %v1394
    %1650 = vmatpush1.bf16.msra.mxu0 %v1393
    %1651 = vmatprep.subr.bf16.mxu0 %v1410
    %1652 = vmatpush1.bf16.msra.mxu0 %v1409
    %1653 = vmatprep.subr.bf16.mxu0 %v1426
    %1654 = vmatpush1.bf16.msra.mxu0 %v1425
    %1655 = vmatprep.subr.bf16.mxu0 %v1442
    %1656 = vmatpush1.bf16.msra.mxu0 %v1441
    %1657 = vmatprep.subr.bf16.mxu0 %v1458
    %1658 = vmatpush1.bf16.msra.mxu0 %v1457
    %1659 = vmatprep.subr.bf16.mxu0 %v1474
    %1660 = vmatpush1.bf16.msra.mxu0 %v1473
    %1661 = vmatprep.subr.bf16.mxu0 %v1490
    %1662 = vmatpush1.bf16.msra.mxu0 %v1489
    %1663 = vmatprep.subr.bf16.mxu0 %v1506
    %1664 = vmatpush1.bf16.msra.mxu0 %v1505
    %1665 = vmatprep.subr.bf16.mxu0 %v1522
    %1666 = vmatpush1.bf16.msra.mxu0 %v1521
    %1667 = vmatprep.subr.bf16.mxu0 %v1538
    %1668 = vmatpush1.bf16.msra.mxu0 %v1537
    %1669 = vmatprep.mubr.bf16.mxu0 %v1296
    %1670 = vmatmul.mubr.bf16.gmra.mrb[0].mxu0 %v1295
    %v1671 = vpop.f32.mrb[0].mxu0
    %v1672 = vadd.f32 %v1560, %v1671
    %v1673 = vpop.f32.mrb[0].mxu0
    %v1674 = vadd.f32 %v1564, %v1673
    %v1675 = vpop.f32.mrb[0].mxu0
    %v1676 = vpop.f32.mrb[0].mxu0
    %1677 = vdwg.mxu0
    %1678 = vmatprep.subr.bf16.mxu0 %v1300
    %1679 = vmatpush1.bf16.msra.mxu0 %v1299
    %1680 = vmatprep.subr.bf16.mxu0 %v1316
    %1681 = vmatpush1.bf16.msra.mxu0 %v1315
    %1682 = vmatprep.subr.bf16.mxu0 %v1332
    %1683 = vmatpush1.bf16.msra.mxu0 %v1331
    %1684 = vmatprep.subr.bf16.mxu0 %v1348
    %1685 = vmatpush1.bf16.msra.mxu0 %v1347
    %1686 = vmatprep.subr.bf16.mxu0 %v1364
    %1687 = vmatpush1.bf16.msra.mxu0 %v1363
    %1688 = vmatprep.subr.bf16.mxu0 %v1380
    %1689 = vmatpush1.bf16.msra.mxu0 %v1379
    %1690 = vmatprep.subr.bf16.mxu0 %v1396
    %1691 = vmatpush1.bf16.msra.mxu0 %v1395
    %1692 = vmatprep.subr.bf16.mxu0 %v1412
    %1693 = vmatpush1.bf16.msra.mxu0 %v1411
    %1694 = vmatprep.subr.bf16.mxu0 %v1428
    %1695 = vmatpush1.bf16.msra.mxu0 %v1427
    %1696 = vmatprep.subr.bf16.mxu0 %v1444
    %1697 = vmatpush1.bf16.msra.mxu0 %v1443
    %1698 = vmatprep.subr.bf16.mxu0 %v1460
    %1699 = vmatpush1.bf16.msra.mxu0 %v1459
    %1700 = vmatprep.subr.bf16.mxu0 %v1476
    %1701 = vmatpush1.bf16.msra.mxu0 %v1475
    %1702 = vmatprep.subr.bf16.mxu0 %v1492
    %1703 = vmatpush1.bf16.msra.mxu0 %v1491
    %1704 = vmatprep.subr.bf16.mxu0 %v1508
    %1705 = vmatpush1.bf16.msra.mxu0 %v1507
    %1706 = vmatprep.subr.bf16.mxu0 %v1524
    %1707 = vmatpush1.bf16.msra.mxu0 %v1523
    %1708 = vmatprep.subr.bf16.mxu0 %v1540
    %1709 = vmatpush1.bf16.msra.mxu0 %v1539
    %1710 = vmatprep.mubr.bf16.mxu0 %v1296
    %1711 = vmatmul.mubr.bf16.gmra.mrb[0].mxu0 %v1295
    %v1712 = vpop.f32.mrb[0].mxu0
    %v1713 = vadd.f32 %v1568, %v1712
    %v1714 = vpop.f32.mrb[0].mxu0
    %v1715 = vadd.f32 %v1572, %v1714
    %v1716 = vpop.f32.mrb[0].mxu0
    %v1717 = vpop.f32.mrb[0].mxu0
    %1718 = vdwg.mxu0
    %1719 = vmatprep.subr.bf16.mxu0 %v1302
    %1720 = vmatpush1.bf16.msra.mxu0 %v1301
    %1721 = vmatprep.subr.bf16.mxu0 %v1318
    %1722 = vmatpush1.bf16.msra.mxu0 %v1317
    %1723 = vmatprep.subr.bf16.mxu0 %v1334
    %1724 = vmatpush1.bf16.msra.mxu0 %v1333
    %1725 = vmatprep.subr.bf16.mxu0 %v1350
    %1726 = vmatpush1.bf16.msra.mxu0 %v1349
    %1727 = vmatprep.subr.bf16.mxu0 %v1366
    %1728 = vmatpush1.bf16.msra.mxu0 %v1365
    %1729 = vmatprep.subr.bf16.mxu0 %v1382
    %1730 = vmatpush1.bf16.msra.mxu0 %v1381
    %1731 = vmatprep.subr.bf16.mxu0 %v1398
    %1732 = vmatpush1.bf16.msra.mxu0 %v1397
    %1733 = vmatprep.subr.bf16.mxu0 %v1414
    %1734 = vmatpush1.bf16.msra.mxu0 %v1413
    %1735 = vmatprep.subr.bf16.mxu0 %v1430
    %1736 = vmatpush1.bf16.msra.mxu0 %v1429
    %1737 = vmatprep.subr.bf16.mxu0 %v1446
    %1738 = vmatpush1.bf16.msra.mxu0 %v1445
    %1739 = vmatprep.subr.bf16.mxu0 %v1462
    %1740 = vmatpush1.bf16.msra.mxu0 %v1461
    %1741 = vmatprep.subr.bf16.mxu0 %v1478
    %1742 = vmatpush1.bf16.msra.mxu0 %v1477
    %1743 = vmatprep.subr.bf16.mxu0 %v1494
    %1744 = vmatpush1.bf16.msra.mxu0 %v1493
    %1745 = vmatprep.subr.bf16.mxu0 %v1510
    %1746 = vmatpush1.bf16.msra.mxu0 %v1509
    %1747 = vmatprep.subr.bf16.mxu0 %v1526
    %1748 = vmatpush1.bf16.msra.mxu0 %v1525
    %1749 = vmatprep.subr.bf16.mxu0 %v1542
    %1750 = vmatpush1.bf16.msra.mxu0 %v1541
    %1751 = vmatprep.mubr.bf16.mxu0 %v1296
    %1752 = vmatmul.mubr.bf16.gmra.mrb[0].mxu0 %v1295
    %v1753 = vpop.f32.mrb[0].mxu0
    %v1754 = vadd.f32 %v1576, %v1753
    %v1755 = vpop.f32.mrb[0].mxu0
    %v1756 = vadd.f32 %v1580, %v1755
    %v1757 = vpop.f32.mrb[0].mxu0
    %v1758 = vpop.f32.mrb[0].mxu0
    %1759 = vdwg.mxu0
    %1760 = vmatprep.subr.bf16.mxu0 %v1304
    %1761 = vmatpush1.bf16.msra.mxu0 %v1303
    %1762 = vmatprep.subr.bf16.mxu0 %v1320
    %1763 = vmatpush1.bf16.msra.mxu0 %v1319
    %1764 = vmatprep.subr.bf16.mxu0 %v1336
    %1765 = vmatpush1.bf16.msra.mxu0 %v1335
    %1766 = vmatprep.subr.bf16.mxu0 %v1352
    %1767 = vmatpush1.bf16.msra.mxu0 %v1351
    %1768 = vmatprep.subr.bf16.mxu0 %v1368
    %1769 = vmatpush1.bf16.msra.mxu0 %v1367
    %1770 = vmatprep.subr.bf16.mxu0 %v1384
    %1771 = vmatpush1.bf16.msra.mxu0 %v1383
    %1772 = vmatprep.subr.bf16.mxu0 %v1400
    %1773 = vmatpush1.bf16.msra.mxu0 %v1399
    %1774 = vmatprep.subr.bf16.mxu0 %v1416
    %1775 = vmatpush1.bf16.msra.mxu0 %v1415
    %1776 = vmatprep.subr.bf16.mxu0 %v1432
    %1777 = vmatpush1.bf16.msra.mxu0 %v1431
    %1778 = vmatprep.subr.bf16.mxu0 %v1448
    %1779 = vmatpush1.bf16.msra.mxu0 %v1447
    %1780 = vmatprep.subr.bf16.mxu0 %v1464
    %1781 = vmatpush1.bf16.msra.mxu0 %v1463
    %1782 = vmatprep.subr.bf16.mxu0 %v1480
    %1783 = vmatpush1.bf16.msra.mxu0 %v1479
    %1784 = vmatprep.subr.bf16.mxu0 %v1496
    %1785 = vmatpush1.bf16.msra.mxu0 %v1495
    %1786 = vmatprep.subr.bf16.mxu0 %v1512
    %1787 = vmatpush1.bf16.msra.mxu0 %v1511
    %1788 = vmatprep.subr.bf16.mxu0 %v1528
    %1789 = vmatpush1.bf16.msra.mxu0 %v1527
    %1790 = vmatprep.subr.bf16.mxu0 %v1544
    %1791 = vmatpush1.bf16.msra.mxu0 %v1543
    %1792 = vmatprep.mubr.bf16.mxu0 %v1296
    %1793 = vmatmul.mubr.bf16.gmra.mrb[0].mxu0 %v1295
    %v1794 = vpop.f32.mrb[0].mxu0
    %v1795 = vadd.f32 %v1584, %v1794
    %v1796 = vpop.f32.mrb[0].mxu0
    %v1797 = vadd.f32 %v1588, %v1796
    %v1798 = vpop.f32.mrb[0].mxu0
    %v1799 = vpop.f32.mrb[0].mxu0
    %1800 = vdwg.mxu0
    %1801 = vmatprep.subr.bf16.mxu0 %v1306
    %1802 = vmatpush1.bf16.msra.mxu0 %v1305
    %1803 = vmatprep.subr.bf16.mxu0 %v1322
    %1804 = vmatpush1.bf16.msra.mxu0 %v1321
    %1805 = vmatprep.subr.bf16.mxu0 %v1338
    %1806 = vmatpush1.bf16.msra.mxu0 %v1337
    %1807 = vmatprep.subr.bf16.mxu0 %v1354
    %1808 = vmatpush1.bf16.msra.mxu0 %v1353
    %1809 = vmatprep.subr.bf16.mxu0 %v1370
    %1810 = vmatpush1.bf16.msra.mxu0 %v1369
    %1811 = vmatprep.subr.bf16.mxu0 %v1386
    %1812 = vmatpush1.bf16.msra.mxu0 %v1385
    %1813 = vmatprep.subr.bf16.mxu0 %v1402
    %1814 = vmatpush1.bf16.msra.mxu0 %v1401
    %1815 = vmatprep.subr.bf16.mxu0 %v1418
    %1816 = vmatpush1.bf16.msra.mxu0 %v1417
    %1817 = vmatprep.subr.bf16.mxu0 %v1434
    %1818 = vmatpush1.bf16.msra.mxu0 %v1433
    %1819 = vmatprep.subr.bf16.mxu0 %v1450
    %1820 = vmatpush1.bf16.msra.mxu0 %v1449
    %1821 = vmatprep.subr.bf16.mxu0 %v1466
    %1822 = vmatpush1.bf16.msra.mxu0 %v1465
    %1823 = vmatprep.subr.bf16.mxu0 %v1482
    %1824 = vmatpush1.bf16.msra.mxu0 %v1481
    %1825 = vmatprep.subr.bf16.mxu0 %v1498
    %1826 = vmatpush1.bf16.msra.mxu0 %v1497
    %1827 = vmatprep.subr.bf16.mxu0 %v1514
    %1828 = vmatpush1.bf16.msra.mxu0 %v1513
    %1829 = vmatprep.subr.bf16.mxu0 %v1530
    %1830 = vmatpush1.bf16.msra.mxu0 %v1529
    %1831 = vmatprep.subr.bf16.mxu0 %v1546
    %1832 = vmatpush1.bf16.msra.mxu0 %v1545
    %1833 = vmatprep.mubr.bf16.mxu0 %v1296
    %1834 = vmatmul.mubr.bf16.gmra.mrb[0].mxu0 %v1295
    %v1835 = vpop.f32.mrb[0].mxu0
    %v1836 = vadd.f32 %v1592, %v1835
    %v1837 = vpop.f32.mrb[0].mxu0
    %v1838 = vadd.f32 %v1596, %v1837
    %v1839 = vpop.f32.mrb[0].mxu0
    %v1840 = vpop.f32.mrb[0].mxu0
    %1841 = vdwg.mxu0
    %1842 = vmatprep.subr.bf16.mxu0 %v1308
    %1843 = vmatpush1.bf16.msra.mxu0 %v1307
    %1844 = vmatprep.subr.bf16.mxu0 %v1324
    %1845 = vmatpush1.bf16.msra.mxu0 %v1323
    %1846 = vmatprep.subr.bf16.mxu0 %v1340
    %1847 = vmatpush1.bf16.msra.mxu0 %v1339
    %1848 = vmatprep.subr.bf16.mxu0 %v1356
    %1849 = vmatpush1.bf16.msra.mxu0 %v1355
    %1850 = vmatprep.subr.bf16.mxu0 %v1372
    %1851 = vmatpush1.bf16.msra.mxu0 %v1371
    %1852 = vmatprep.subr.bf16.mxu0 %v1388
    %1853 = vmatpush1.bf16.msra.mxu0 %v1387
    %1854 = vmatprep.subr.bf16.mxu0 %v1404
    %1855 = vmatpush1.bf16.msra.mxu0 %v1403
    %1856 = vmatprep.subr.bf16.mxu0 %v1420
    %1857 = vmatpush1.bf16.msra.mxu0 %v1419
    %1858 = vmatprep.subr.bf16.mxu0 %v1436
    %1859 = vmatpush1.bf16.msra.mxu0 %v1435
    %1860 = vmatprep.subr.bf16.mxu0 %v1452
    %1861 = vmatpush1.bf16.msra.mxu0 %v1451
    %1862 = vmatprep.subr.bf16.mxu0 %v1468
    %1863 = vmatpush1.bf16.msra.mxu0 %v1467
    %1864 = vmatprep.subr.bf16.mxu0 %v1484
    %1865 = vmatpush1.bf16.msra.mxu0 %v1483
    %1866 = vmatprep.subr.bf16.mxu0 %v1500
    %1867 = vmatpush1.bf16.msra.mxu0 %v1499
    %1868 = vmatprep.subr.bf16.mxu0 %v1516
    %1869 = vmatpush1.bf16.msra.mxu0 %v1515
    %1870 = vmatprep.subr.bf16.mxu0 %v1532
    %1871 = vmatpush1.bf16.msra.mxu0 %v1531
    %1872 = vmatprep.subr.bf16.mxu0 %v1548
    %1873 = vmatpush1.bf16.msra.mxu0 %v1547
    %1874 = vmatprep.mubr.bf16.mxu0 %v1296
    %1875 = vmatmul.mubr.bf16.gmra.mrb[0].mxu0 %v1295
    %v1876 = vpop.f32.mrb[0].mxu0
    %v1877 = vadd.f32 %v1600, %v1876
    %v1878 = vpop.f32.mrb[0].mxu0
    %v1879 = vadd.f32 %v1604, %v1878
    %v1880 = vpop.f32.mrb[0].mxu0
    %v1881 = vpop.f32.mrb[0].mxu0
    %1882 = vdwg.mxu0
    %1883 = vmatprep.subr.bf16.mxu0 %v1310
    %1884 = vmatpush1.bf16.msra.mxu0 %v1309
    %1885 = vmatprep.subr.bf16.mxu0 %v1326
    %1886 = vmatpush1.bf16.msra.mxu0 %v1325
    %1887 = vmatprep.subr.bf16.mxu0 %v1342
    %1888 = vmatpush1.bf16.msra.mxu0 %v1341
    %1889 = vmatprep.subr.bf16.mxu0 %v1358
    %1890 = vmatpush1.bf16.msra.mxu0 %v1357
    %1891 = vmatprep.subr.bf16.mxu0 %v1374
    %1892 = vmatpush1.bf16.msra.mxu0 %v1373
    %1893 = vmatprep.subr.bf16.mxu0 %v1390
    %1894 = vmatpush1.bf16.msra.mxu0 %v1389
    %1895 = vmatprep.subr.bf16.mxu0 %v1406
    %1896 = vmatpush1.bf16.msra.mxu0 %v1405
    %1897 = vmatprep.subr.bf16.mxu0 %v1422
    %1898 = vmatpush1.bf16.msra.mxu0 %v1421
    %1899 = vmatprep.subr.bf16.mxu0 %v1438
    %1900 = vmatpush1.bf16.msra.mxu0 %v1437
    %1901 = vmatprep.subr.bf16.mxu0 %v1454
    %1902 = vmatpush1.bf16.msra.mxu0 %v1453
    %1903 = vmatprep.subr.bf16.mxu0 %v1470
    %1904 = vmatpush1.bf16.msra.mxu0 %v1469
    %1905 = vmatprep.subr.bf16.mxu0 %v1486
    %1906 = vmatpush1.bf16.msra.mxu0 %v1485
    %1907 = vmatprep.subr.bf16.mxu0 %v1502
    %1908 = vmatpush1.bf16.msra.mxu0 %v1501
    %1909 = vmatprep.subr.bf16.mxu0 %v1518
    %1910 = vmatpush1.bf16.msra.mxu0 %v1517
    %1911 = vmatprep.subr.bf16.mxu0 %v1534
    %1912 = vmatpush1.bf16.msra.mxu0 %v1533
    %1913 = vmatprep.subr.bf16.mxu0 %v1550
    %1914 = vmatpush1.bf16.msra.mxu0 %v1549
    %1915 = vmatprep.mubr.bf16.mxu0 %v1296
    %1916 = vmatmul.mubr.bf16.gmra.mrb[0].mxu0 %v1295
    %v1917 = vpop.f32.mrb[0].mxu0
    %v1918 = vadd.f32 %v1608, %v1917
    %v1919 = vpop.f32.mrb[0].mxu0
    %v1920 = vadd.f32 %v1612, %v1919
    %v1921 = vpop.f32.mrb[0].mxu0
    %v1922 = vpop.f32.mrb[0].mxu0
    %1923 = vdwg.mxu0
    %1924 = vmatprep.subr.bf16.mxu0 %v1312
    %1925 = vmatpush1.bf16.msra.mxu0 %v1311
    %1926 = vmatprep.subr.bf16.mxu0 %v1328
    %1927 = vmatpush1.bf16.msra.mxu0 %v1327
    %1928 = vmatprep.subr.bf16.mxu0 %v1344
    %1929 = vmatpush1.bf16.msra.mxu0 %v1343
    %1930 = vmatprep.subr.bf16.mxu0 %v1360
    %1931 = vmatpush1.bf16.msra.mxu0 %v1359
    %1932 = vmatprep.subr.bf16.mxu0 %v1376
    %1933 = vmatpush1.bf16.msra.mxu0 %v1375
    %1934 = vmatprep.subr.bf16.mxu0 %v1392
    %1935 = vmatpush1.bf16.msra.mxu0 %v1391
    %1936 = vmatprep.subr.bf16.mxu0 %v1408
    %1937 = vmatpush1.bf16.msra.mxu0 %v1407
    %1938 = vmatprep.subr.bf16.mxu0 %v1424
    %1939 = vmatpush1.bf16.msra.mxu0 %v1423
    %1940 = vmatprep.subr.bf16.mxu0 %v1440
    %1941 = vmatpush1.bf16.msra.mxu0 %v1439
    %1942 = vmatprep.subr.bf16.mxu0 %v1456
    %1943 = vmatpush1.bf16.msra.mxu0 %v1455
    %1944 = vmatprep.subr.bf16.mxu0 %v1472
    %1945 = vmatpush1.bf16.msra.mxu0 %v1471
    %1946 = vmatprep.subr.bf16.mxu0 %v1488
    %1947 = vmatpush1.bf16.msra.mxu0 %v1487
    %1948 = vmatprep.subr.bf16.mxu0 %v1504
    %1949 = vmatpush1.bf16.msra.mxu0 %v1503
    %1950 = vmatprep.subr.bf16.mxu0 %v1520
    %1951 = vmatpush1.bf16.msra.mxu0 %v1519
    %1952 = vmatprep.subr.bf16.mxu0 %v1536
    %1953 = vmatpush1.bf16.msra.mxu0 %v1535
    %1954 = vmatprep.subr.bf16.mxu0 %v1552
    %1955 = vmatpush1.bf16.msra.mxu0 %v1551
    %1956 = vmatprep.mubr.bf16.mxu0 %v1296
    %1957 = vmatmul.mubr.bf16.gmra.mrb[0].mxu0 %v1295
    %v1958 = vpop.f32.mrb[0].mxu0
    %v1959 = vadd.f32 %v1616, %v1958
    %v1960 = vpop.f32.mrb[0].mxu0
    %v1961 = vadd.f32 %v1620, %v1960
    %v1962 = vpop.f32.mrb[0].mxu0
    %v1963 = vpop.f32.mrb[0].mxu0
    %1964 = vdwg.mxu0
    %v1965 = vmax.f32 %v1672, 0.0
    %v1966 = vmax.f32 %v1674, 0.0
    %v1967 = vmax.f32 %v1713, 0.0
    %v1968 = vmax.f32 %v1715, 0.0
    %v1969 = vmax.f32 %v1754, 0.0
    %v1970 = vmax.f32 %v1756, 0.0
    %v1971 = vmax.f32 %v1795, 0.0
    %v1972 = vmax.f32 %v1797, 0.0
    %v1973 = vmax.f32 %v1836, 0.0
    %v1974 = vmax.f32 %v1838, 0.0
    %v1975 = vmax.f32 %v1877, 0.0
    %v1976 = vmax.f32 %v1879, 0.0
    %v1977 = vmax.f32 %v1918, 0.0
    %v1978 = vmax.f32 %v1920, 0.0
    %v1979 = vmax.f32 %v1959, 0.0
    %v1980 = vmax.f32 %v1961, 0.0
    %s1981 = sld [smem:[#allocation8 + $0xc]]
    %s1982 = sld [smem:[#allocation8]]
    %v1983 = vstv %s1982
    %v1984 = vmul.f32 %v1983, %v1965
    %v1985 = vmul.f32 %v1983, %v1966
    %v1986 = vmul.f32 %v1983, %v1967
    %v1987 = vmul.f32 %v1983, %v1968
    %v1988 = vstv %s1981
    %v1989 = vadd.f32 %v1988, %v1984
    %v1990 = vadd.f32 %v1988, %v1985
    %v1991 = vadd.f32 %v1988, %v1986
    %v1992 = vadd.f32 %v1988, %v1987
    %s1993 = sld [smem:[#allocation8 + $0x1]]
    %v1994 = vstv %s1993
    %v1995 = vmul.f32 %v1994, %v1969
    %v1996 = vmul.f32 %v1994, %v1970
    %v1997 = vmul.f32 %v1994, %v1971
    %v1998 = vmul.f32 %v1994, %v1972
    %v1999 = vadd.f32 %v1989, %v1995
    %v2000 = vadd.f32 %v1990, %v1996
    %v2001 = vadd.f32 %v1991, %v1997
    %v2002 = vadd.f32 %v1992, %v1998
    %s2003 = sld [smem:[#allocation8 + $0x2]]
    %v2004 = vstv %s2003
    %v2005 = vmul.f32 %v2004, %v1973
    %v2006 = vmul.f32 %v2004, %v1974
    %v2007 = vmul.f32 %v2004, %v1975
    %v2008 = vmul.f32 %v2004, %v1976
    %v2009 = vadd.f32 %v1999, %v2005
    %v2010 = vadd.f32 %v2000, %v2006
    %v2011 = vadd.f32 %v2001, %v2007
    %v2012 = vadd.f32 %v2002, %v2008
    %s2013 = sld [smem:[#allocation8 + $0x3]]
    %v2014 = vstv %s2013
    %v2015 = vmul.f32 %v2014, %v1977
    %v2016 = vmul.f32 %v2014, %v1978
    %v2017 = vmul.f32 %v2014, %v1979
    %v2018 = vmul.f32 %v2014, %v1980
    %v2019 = vadd.f32 %v2009, %v2015
    %v2020 = vadd.f32 %v2010, %v2016
    %v2021 = vadd.f32 %v2011, %v2017
    %v2022 = vadd.f32 %v2012, %v2018
    %v2027 = vcombine.low %v2019, %v2020
    %v2028 = vcombine.low %v2021, %v2022
    %v2030 = vunpack.c.l.s4 1983009808
    %v2031 = vunpack.c.0.s8 %v2030
    %v2032 = vlaneseq
    %v2033 = vshrl.u32 %v2032, 7
    %v2034 = vsub.s32 %v2031, %v2033
    %v2035 = vrot.slane %v2027, %v2034
    %v2037 = vunpack.c.l.s4 1983009808
    %v2038 = vunpack.c.0.s8 %v2037
    %v2039 = vlaneseq
    %v2040 = vshrl.u32 %v2039, 7
    %v2041 = vsub.s32 %v2038, %v2040
    %v2042 = vrot.slane %v2028, %v2041
    %v2043 = vcombine.low %v2035, %v2042
    %2045 = vst [vmem:[%s11] sm:$0xff] %v2043
    %s2046 = sld [smem:[#allocation8 + $0xd]]
    %s2047 = sld [smem:[#allocation8 + $0x4]]
    %v2048 = vstv %s2047
    %v2049 = vmul.f32 %v2048, %v1965
    %v2050 = vmul.f32 %v2048, %v1966
    %v2051 = vmul.f32 %v2048, %v1967
    %v2052 = vmul.f32 %v2048, %v1968
    %v2053 = vstv %s2046
    %v2054 = vadd.f32 %v2053, %v2049
    %v2055 = vadd.f32 %v2053, %v2050
    %v2056 = vadd.f32 %v2053, %v2051
    %v2057 = vadd.f32 %v2053, %v2052
    %s2058 = sld [smem:[#allocation8 + $0x5]]
    %v2059 = vstv %s2058
    %v2060 = vmul.f32 %v2059, %v1969
    %v2061 = vmul.f32 %v2059, %v1970
    %v2062 = vmul.f32 %v2059, %v1971
    %v2063 = vmul.f32 %v2059, %v1972
    %v2064 = vadd.f32 %v2054, %v2060
    %v2065 = vadd.f32 %v2055, %v2061
    %v2066 = vadd.f32 %v2056, %v2062
    %v2067 = vadd.f32 %v2057, %v2063
    %s2068 = sld [smem:[#allocation8 + $0x6]]
    %v2069 = vstv %s2068
    %v2070 = vmul.f32 %v2069, %v1973
    %v2071 = vmul.f32 %v2069, %v1974
    %v2072 = vmul.f32 %v2069, %v1975
    %v2073 = vmul.f32 %v2069, %v1976
    %v2074 = vadd.f32 %v2064, %v2070
    %v2075 = vadd.f32 %v2065, %v2071
    %v2076 = vadd.f32 %v2066, %v2072
    %v2077 = vadd.f32 %v2067, %v2073
    %s2078 = sld [smem:[#allocation8 + $0x7]]
    %v2079 = vstv %s2078
    %v2080 = vmul.f32 %v2079, %v1977
    %v2081 = vmul.f32 %v2079, %v1978
    %v2082 = vmul.f32 %v2079, %v1979
    %v2083 = vmul.f32 %v2079, %v1980
    %v2084 = vadd.f32 %v2074, %v2080
    %v2085 = vadd.f32 %v2075, %v2081
    %v2086 = vadd.f32 %v2076, %v2082
    %v2087 = vadd.f32 %v2077, %v2083
    %v2092 = vcombine.low %v2084, %v2085
    %v2093 = vcombine.low %v2086, %v2087
    %v2095 = vunpack.c.l.s4 1983009808
    %v2096 = vunpack.c.0.s8 %v2095
    %v2097 = vlaneseq
    %v2098 = vshrl.u32 %v2097, 7
    %v2099 = vsub.s32 %v2096, %v2098
    %v2100 = vrot.slane %v2092, %v2099
    %v2102 = vunpack.c.l.s4 1983009808
    %v2103 = vunpack.c.0.s8 %v2102
    %v2104 = vlaneseq
    %v2105 = vshrl.u32 %v2104, 7
    %v2106 = vsub.s32 %v2103, %v2105
    %v2107 = vrot.slane %v2093, %v2106
    %v2108 = vcombine.low %v2100, %v2107
    %2110 = vst [vmem:[%s11 + $0x8] sm:$0xff] %v2108
    %s2111 = sld [smem:[#allocation8 + $0xe]]
    %s2112 = sld [smem:[#allocation8 + $0x8]]
    %v2113 = vstv %s2112
    %v2114 = vmul.f32 %v2113, %v1965
    %v2115 = vmul.f32 %v2113, %v1966
    %v2116 = vmul.f32 %v2113, %v1967
    %v2117 = vmul.f32 %v2113, %v1968
    %v2118 = vstv %s2111
    %v2119 = vadd.f32 %v2118, %v2114
    %v2120 = vadd.f32 %v2118, %v2115
    %v2121 = vadd.f32 %v2118, %v2116
    %v2122 = vadd.f32 %v2118, %v2117
    %s2123 = sld [smem:[#allocation8 + $0x9]]
    %v2124 = vstv %s2123
    %v2125 = vmul.f32 %v2124, %v1969
    %v2126 = vmul.f32 %v2124, %v1970
    %v2127 = vmul.f32 %v2124, %v1971
    %v2128 = vmul.f32 %v2124, %v1972
    %v2129 = vadd.f32 %v2119, %v2125
    %v2130 = vadd.f32 %v2120, %v2126
    %v2131 = vadd.f32 %v2121, %v2127
    %v2132 = vadd.f32 %v2122, %v2128
    %s2133 = sld [smem:[#allocation8 + $0xa]]
    %v2134 = vstv %s2133
    %v2135 = vmul.f32 %v2134, %v1973
    %v2136 = vmul.f32 %v2134, %v1974
    %v2137 = vmul.f32 %v2134, %v1975
    %v2138 = vmul.f32 %v2134, %v1976
    %v2139 = vadd.f32 %v2129, %v2135
    %v2140 = vadd.f32 %v2130, %v2136
    %v2141 = vadd.f32 %v2131, %v2137
    %v2142 = vadd.f32 %v2132, %v2138
    %s2143 = sld [smem:[#allocation8 + $0xb]]
    %v2144 = vstv %s2143
    %v2145 = vmul.f32 %v2144, %v1977
    %v2146 = vmul.f32 %v2144, %v1978
    %v2147 = vmul.f32 %v2144, %v1979
    %v2148 = vmul.f32 %v2144, %v1980
    %v2149 = vadd.f32 %v2139, %v2145
    %v2150 = vadd.f32 %v2140, %v2146
    %v2151 = vadd.f32 %v2141, %v2147
    %v2152 = vadd.f32 %v2142, %v2148
    %v2157 = vcombine.low %v2149, %v2150
    %v2158 = vcombine.low %v2151, %v2152
    %v2160 = vunpack.c.l.s4 1983009808
    %v2161 = vunpack.c.0.s8 %v2160
    %v2162 = vlaneseq
    %v2163 = vshrl.u32 %v2162, 7
    %v2164 = vsub.s32 %v2161, %v2163
    %v2165 = vrot.slane %v2157, %v2164
    %v2167 = vunpack.c.l.s4 1983009808
    %v2168 = vunpack.c.0.s8 %v2167
    %v2169 = vlaneseq
    %v2170 = vshrl.u32 %v2169, 7
    %v2171 = vsub.s32 %v2168, %v2170
    %v2172 = vrot.slane %v2158, %v2171
    %v2173 = vcombine.low %v2165, %v2172
    %2175 = vst [vmem:[%s11 + $0x10] sm:$0xff] %v2173
    // Predicated region
    $region83: #{molecule_autoencoder_forward.1} parent=1 // pred_check
      _
    $region84: #{molecule_autoencoder_forward.1} parent=1 // pred_check_branch
      %2177 = sbr.rel (0) target = $region86
    $region85: #{molecule_autoencoder_forward.1} parent=1 // pred_region
      _
    $region86: #{molecule_autoencoder_forward.1} parent=1 // pred_fallthru
      _
    // Predicated region
    $region87: #{molecule_autoencoder_forward.1} parent=1 // pred_check
      _
    $region88: #{molecule_autoencoder_forward.1} parent=1 // pred_check_branch
      %2179 = sbr.rel (0) target = $region90
    $region89: #{molecule_autoencoder_forward.1} parent=1 // pred_region
      _
    $region90: #{molecule_autoencoder_forward.1} parent=1 // pred_fallthru
      _
    // Predicated region
    $region91: #{molecule_autoencoder_forward.1} parent=1 // pred_check
      _
    $region92: #{molecule_autoencoder_forward.1} parent=1 // pred_check_branch
      %2181 = sbr.rel (0) target = $region94
    $region93: #{molecule_autoencoder_forward.1} parent=1 // pred_region
      _
    $region94: #{molecule_autoencoder_forward.1} parent=1 // pred_fallthru
      _
    // Predicated region
    $region95: #{molecule_autoencoder_forward.1} parent=1 // pred_check
      _
    $region96: #{molecule_autoencoder_forward.1} parent=1 // pred_check_branch
      %2183 = sbr.rel (0) target = $region98
    $region97: #{molecule_autoencoder_forward.1} parent=1 // pred_region
      _
    $region98: #{molecule_autoencoder_forward.1} parent=1 // pred_fallthru
      _
    %2184 = vsyncpa [#allocation6], 1
    %2185 = vsyncpa [#allocation7], 1
  %2186 = vsyncmov [#allocation4]
  %s2187 = vpop.sfrf %2186
  %p2188 = scmp.eq.s32.totalorder %s2187, 0
  %p2189 = pneg %p2188
  %2191 = shalt.err (%p2189)
  %s2192 = scalar_lea.sflag [#allocation4], 1
  %2193 = vsyncmov %s2192
  %s2194 = vpop.sfrf %2193
  %p2195 = scmp.eq.s32.totalorder %s2194, 0
  %p2196 = pneg %p2195
  %2198 = shalt.err (%p2196)

</llo_original>
